<compile_context>
chip_gen: v5e
topology: v5e:2x2
jax: 0.10.0
libtpu: 0.0.40
codegen_flags: <defaults>
</compile_context>

<pallas_src>
import jax
import jax.numpy as jnp
from jax import lax
from jax.experimental import pallas as pl
from jax.experimental.pallas import tpu as pltpu


def basic_block_kernel(x_ref, wb1_ref, s1_ref, b1_ref, wb2_ref, s2_ref, b2_ref,
                       out_ref, xbuf_ref, ybuf_ref):
    """One batch block (B_blk samples) per grid step, lane-dense folded layout.

    x_ref    : (B, H, W*C)  f32 input, (w, c) folded to w*C + c on the lane axis
    wb*_ref  : (3, W*C, W*C) bf16 banded conv weights (one matrix per kernel row)
    s*/b*    : (1, W*C)     f32 folded BN scale / bias (per-channel, tiled over w)
    out_ref  : (B, H, W*C)
    xbuf_ref : (>=B*(H+2), W*C) bf16 scratch: stacked height-padded input
    ybuf_ref : (>=B*(H+2), W*C) bf16 scratch: stacked height-padded conv1 act.
    """
    B, H, WC = out_ref.shape
    pitch = H + 2
    P = B * pitch          # stacked height-padded rows actually used
    M = P - 2              # rows fed to each per-dy matmul

    xz = jnp.zeros((1, WC), xbuf_ref.dtype)
    yz = jnp.zeros((1, WC), ybuf_ref.dtype)

    # Stack the B height-padded samples into xbuf (bf16 cast for the MXU).
    # Halo rows are re-zeroed unconditionally every step (cheap full-lane row
    # stores) so correctness never depends on a program_id==0 guard even when
    # the grid is split across TensorCores.
    for b in range(B):
        r0 = b * pitch
        xbuf_ref[r0:r0 + 1, :] = xz
        xbuf_ref[r0 + H + 1:r0 + H + 2, :] = xz
        xbuf_ref[r0 + 1:r0 + 1 + H, :] = x_ref[b].astype(xbuf_ref.dtype)

    # ---- conv1: 3 MXU matmuls over the whole stacked block.  The banded
    #      weight absorbs the dx shift, the channel contraction and the width
    #      zero-pad; the zero halo rows prevent cross-sample bleed. ----
    acc1 = jnp.zeros((M, WC), jnp.float32)
    for dy in range(3):
        acc1 = acc1 + jnp.dot(xbuf_ref[dy:dy + M, :], wb1_ref[dy],
                              preferred_element_type=jnp.float32)

    # ---- BN1 (folded affine) + ReLU, written back height-padded for conv2.
    #      acc1 row r lands at ybuf row r+1: every valid row ends up at its
    #      padded position; every cross-sample garbage row lands on a halo
    #      row, which is re-zeroed right below. ----
    ybuf_ref[1:P - 1, :] = jnp.maximum(
        acc1 * s1_ref[...] + b1_ref[...], 0.0).astype(ybuf_ref.dtype)
    for b in range(B):
        r0 = b * pitch
        ybuf_ref[r0:r0 + 1, :] = yz
        ybuf_ref[r0 + H + 1:r0 + H + 2, :] = yz

    # ---- conv2 ----
    acc2 = jnp.zeros((M, WC), jnp.float32)
    for dy in range(3):
        acc2 = acc2 + jnp.dot(ybuf_ref[dy:dy + M, :], wb2_ref[dy],
                              preferred_element_type=jnp.float32)

    # ---- BN2 + residual (f32, straight from the input block) + ReLU.
    #      Only the H valid rows per sample are copied out; the halo-adjacent
    #      garbage rows are dropped.  Full-lane (WC=128) stores. ----
    for b in range(B):
        r0 = b * pitch
        o = (acc2[r0:r0 + H] * s2_ref[...] + b2_ref[...]
             + x_ref[b].astype(jnp.float32))
        out_ref[b] = jnp.maximum(o, 0.0).astype(out_ref.dtype)


def _banded_conv_weight(w, width, dtype=jnp.bfloat16):
    """w: (3, 3, Cin, Cout) HWIO -> banded (3, width*Cin, width*Cout) in `dtype`.

    band[dy, wi*Cin + ci, wo*Cout + co] = w[dy, wi - wo + 1, ci, co] when
    |wi - wo| <= 1, else 0.  Multiplying a folded row (width*Cin,) by band[dy]
    performs the dx shift, the channel contraction and the width zero-padding
    of the 3x3 conv in a single dense matmul.
    """
    kh, kw, cin, cout = w.shape
    shifts = jnp.stack([jnp.eye(width, k=1 - dx, dtype=jnp.float32)
                        for dx in range(kw)])                       # (kw, W, W)
    band = jnp.einsum('xab,yxio->yaibo', shifts, w.astype(jnp.float32))
    return band.reshape(kh, width * cin, width * cout).astype(dtype)


def _pick_batch_block(n, max_blk=8):
    """Largest divisor of n (<= max_blk) preferring an even grid (v7x megacore)."""
    divs = [d for d in range(1, min(n, max_blk) + 1) if n % d == 0]
    even = [d for d in divs if (n // d) % 2 == 0]
    return max(even) if even else max(divs)


@jax.jit
def basic_block(x_nchw, w1, s1, b1, w2, s2, b2):
    """Runs BasicBlock forward (stride=1, downsample=None). x is NCHW."""
    N, C, H, W = x_nchw.shape
    Cout = w1.shape[-1]
    WC = W * Cout  # Cin == Cout (no downsample path)

    B_blk = _pick_batch_block(N)
    pitch = H + 2
    p_rows = -(-(B_blk * pitch) // 8) * 8   # scratch rows, 8-sublane aligned

    # NCHW -> NHWC -> folded (N, H, W*C)   (layout glue)
    # TODO(synk): when stacking BasicBlocks, keep this folded layout end-to-end
    # to avoid the HBM round trips of the boundary transposes.
    x = jnp.transpose(x_nchw, (0, 2, 3, 1)).reshape(N, H, W * C)

    wb1 = _banded_conv_weight(w1, W)   # (3, W*C, W*C) bf16
    wb2 = _banded_conv_weight(w2, W)

    # Folded (per-channel, tiled over w) BN scale / bias, kept in f32.
    s1f = jnp.tile(s1.astype(jnp.float32), W).reshape(1, WC)
    b1f = jnp.tile(b1.astype(jnp.float32), W).reshape(1, WC)
    s2f = jnp.tile(s2.astype(jnp.float32), W).reshape(1, WC)
    b2f = jnp.tile(b2.astype(jnp.float32), W).reshape(1, WC)

    out_folded = pl.pallas_call(
        basic_block_kernel,
        out_shape=jax.ShapeDtypeStruct((N, H, WC), x_nchw.dtype),
        grid_spec=pltpu.PrefetchScalarGridSpec(
            num_scalar_prefetch=0,
            grid=(N // B_blk,),
            in_specs=[
                pl.BlockSpec((B_blk, H, WC), lambda n: (n, 0, 0)),   # x (folded)
                pl.BlockSpec((3, WC, WC), lambda n: (0, 0, 0)),      # wb1
                pl.BlockSpec((1, WC), lambda n: (0, 0)),             # s1
                pl.BlockSpec((1, WC), lambda n: (0, 0)),             # b1
                pl.BlockSpec((3, WC, WC), lambda n: (0, 0, 0)),      # wb2
                pl.BlockSpec((1, WC), lambda n: (0, 0)),             # s2
                pl.BlockSpec((1, WC), lambda n: (0, 0)),             # b2
            ],
            out_specs=pl.BlockSpec((B_blk, H, WC), lambda n: (n, 0, 0)),
            scratch_shapes=[pltpu.VMEM((p_rows, WC), jnp.bfloat16),
                            pltpu.VMEM((p_rows, WC), jnp.bfloat16)],
        ),
        compiler_params=pltpu.CompilerParams(
            dimension_semantics=("parallel",)),
    )(x, wb1, s1f, b1f, wb2, s2f, b2f)

    # folded -> NHWC -> NCHW (glue)
    out = out_folded.reshape(N, H, W, Cout)
    return jnp.transpose(out, (0, 3, 1, 2))


def reference_block(x_nchw, w1, s1, b1, w2, s2, b2):
    """Pure-JAX reference (lax conv, f32), NCHW in / NCHW out."""
    x = jnp.transpose(x_nchw, (0, 2, 3, 1))
    dn = ('NHWC', 'HWIO', 'NHWC')
    y = lax.conv_general_dilated(x, w1, (1, 1), 'SAME', dimension_numbers=dn)
    y = jnp.maximum(y * s1 + b1, 0.0)
    y = lax.conv_general_dilated(y, w2, (1, 1), 'SAME', dimension_numbers=dn)
    y = y * s2 + b2
    y = jnp.maximum(y + x, 0.0)
    return jnp.transpose(y, (0, 3, 1, 2))


if __name__ == "__main__":
    # Shapes consistent with BasicBlock(inplanes=8, planes=8, stride=1);
    # W * C = 16 * 8 = 128 makes the folded layout exactly lane-wide.
    # N=8 so the batch-blocked grid is exercised (B_blk=4, grid=(2,)).
    N, C, H, W = 8, 8, 16, 16
    eps = 1e-5

    key = jax.random.PRNGKey(0)
    ks = jax.random.split(key, 11)

    x = jax.random.normal(ks[0], (N, C, H, W), jnp.float32)

    # conv weights in HWIO layout (deterministic init)
    w1 = jax.random.normal(ks[1], (3, 3, C, C), jnp.float32) * 0.1
    w2 = jax.random.normal(ks[2], (3, 3, C, C), jnp.float32) * 0.1

    # BN1 params (eval mode, folded)
    gamma1 = 1.0 + 0.1 * jax.random.normal(ks[3], (C,), jnp.float32)
    beta1 = 0.1 * jax.random.normal(ks[4], (C,), jnp.float32)
    mean1 = 0.1 * jax.random.normal(ks[5], (C,), jnp.float32)
    var1 = 0.5 + jnp.abs(jax.random.normal(ks[6], (C,), jnp.float32))
    s1 = gamma1 / jnp.sqrt(var1 + eps)
    b1 = beta1 - mean1 * s1

    # BN2 params (eval mode, folded)
    gamma2 = 1.0 + 0.1 * jax.random.normal(ks[7], (C,), jnp.float32)
    beta2 = 0.1 * jax.random.normal(ks[8], (C,), jnp.float32)
    mean2 = 0.1 * jax.random.normal(ks[9], (C,), jnp.float32)
    var2 = 0.5 + jnp.abs(jax.random.normal(ks[10], (C,), jnp.float32))
    s2 = gamma2 / jnp.sqrt(var2 + eps)
    b2 = beta2 - mean2 * s2

    out = basic_block(x, w1, s1, b1, w2, s2, b2)
    out = jax.block_until_ready(out)

    ref = jax.block_until_ready(reference_block(x, w1, s1, b1, w2, s2, b2))
    assert out.shape == (N, C, H, W)
    # Tolerance loosened for bf16 matmul operands (f32 accumulation/BN/residual).
    assert jnp.allclose(out, ref, atol=5e-2, rtol=5e-2), (
        f"max abs err = {jnp.max(jnp.abs(out - ref))}")

    print("KERNEL_OK")
</pallas_src>

<mosaic_0001>
module attributes {stable_mosaic.version = 11 : i64} {
  func.func @basic_block_kernel(%arg0: i32, %arg1: memref<4x16x128xf32, #tpu.memory_space<vmem>>, %arg2: memref<3x128x128xbf16, #tpu.memory_space<vmem>>, %arg3: memref<1x128xf32, #tpu.memory_space<vmem>>, %arg4: memref<1x128xf32, #tpu.memory_space<vmem>>, %arg5: memref<3x128x128xbf16, #tpu.memory_space<vmem>>, %arg6: memref<1x128xf32, #tpu.memory_space<vmem>>, %arg7: memref<1x128xf32, #tpu.memory_space<vmem>>, %arg8: memref<4x16x128xf32, #tpu.memory_space<vmem>>, %arg9: memref<72x128xbf16, #tpu.memory_space<vmem>>, %arg10: memref<72x128xbf16, #tpu.memory_space<vmem>>) attributes {dimension_semantics = [#tpu.dimension_semantics<parallel>], iteration_bounds = array<i64: 2>, scalar_prefetch = 0 : i64, scratch_operands = 2 : i64, tpu.core_type = #tpu.core_type<tc>, window_params = [{transform_indices = @transform_0, window_bounds = array<i64: 4, 16, 128>}, {pipeline_mode = #tpu.pipeline_mode<synchronous>, transform_indices = @transform_1, window_bounds = array<i64: 3, 128, 128>}, {pipeline_mode = #tpu.pipeline_mode<synchronous>, transform_indices = @transform_2, window_bounds = array<i64: 1, 128>}, {pipeline_mode = #tpu.pipeline_mode<synchronous>, transform_indices = @transform_3, window_bounds = array<i64: 1, 128>}, {pipeline_mode = #tpu.pipeline_mode<synchronous>, transform_indices = @transform_4, window_bounds = array<i64: 3, 128, 128>}, {pipeline_mode = #tpu.pipeline_mode<synchronous>, transform_indices = @transform_5, window_bounds = array<i64: 1, 128>}, {pipeline_mode = #tpu.pipeline_mode<synchronous>, transform_indices = @transform_6, window_bounds = array<i64: 1, 128>}, {transform_indices = @transform_7, window_bounds = array<i64: 4, 16, 128>}]} {
    %cst = arith.constant 0.000000e+00 : bf16
    %0 = vector.broadcast %cst : bf16 to vector<1x128xbf16>
    %cst_0 = arith.constant 0.000000e+00 : bf16
    %1 = vector.broadcast %cst_0 : bf16 to vector<1x128xbf16>
    %c0 = arith.constant 0 : index
    %c0_1 = arith.constant 0 : index
    %2 = vector.load %arg9[%c0, %c0_1] : memref<72x128xbf16, #tpu.memory_space<vmem>>, vector<1x128xbf16>
    tpu.vector_store %arg9[%c0, %c0_1], %0 {strides = array<i32>} : memref<72x128xbf16, #tpu.memory_space<vmem>>, vector<1x128xbf16>,
    %c17 = arith.constant 17 : index
    %c0_2 = arith.constant 0 : index
    %3 = vector.load %arg9[%c17, %c0_2] : memref<72x128xbf16, #tpu.memory_space<vmem>>, vector<1x128xbf16>
    tpu.vector_store %arg9[%c17, %c0_2], %0 {strides = array<i32>} : memref<72x128xbf16, #tpu.memory_space<vmem>>, vector<1x128xbf16>,
    %c0_3 = arith.constant 0 : index
    %c0_4 = arith.constant 0 : index
    %c0_5 = arith.constant 0 : index
    %4 = vector.load %arg1[%c0_3, %c0_4, %c0_5] : memref<4x16x128xf32, #tpu.memory_space<vmem>>, vector<1x16x128xf32>
    %5 = vector.shape_cast %4 : vector<1x16x128xf32> to vector<16x128xf32>
    %6 = arith.truncf %5 : vector<16x128xf32> to vector<16x128xbf16>
    %c1 = arith.constant 1 : index
    %c0_6 = arith.constant 0 : index
    %7 = vector.load %arg9[%c1, %c0_6] : memref<72x128xbf16, #tpu.memory_space<vmem>>, vector<16x128xbf16>
    tpu.vector_store %arg9[%c1, %c0_6], %6 {strides = array<i32>} : memref<72x128xbf16, #tpu.memory_space<vmem>>, vector<16x128xbf16>,
    %c18 = arith.constant 18 : index
    %c0_7 = arith.constant 0 : index
    %8 = vector.load %arg9[%c18, %c0_7] : memref<72x128xbf16, #tpu.memory_space<vmem>>, vector<1x128xbf16>
    tpu.vector_store %arg9[%c18, %c0_7], %0 {strides = array<i32>} : memref<72x128xbf16, #tpu.memory_space<vmem>>, vector<1x128xbf16>,
    %c35 = arith.constant 35 : index
    %c0_8 = arith.constant 0 : index
    %9 = vector.load %arg9[%c35, %c0_8] : memref<72x128xbf16, #tpu.memory_space<vmem>>, vector<1x128xbf16>
    tpu.vector_store %arg9[%c35, %c0_8], %0 {strides = array<i32>} : memref<72x128xbf16, #tpu.memory_space<vmem>>, vector<1x128xbf16>,
    %c1_9 = arith.constant 1 : index
    %c0_10 = arith.constant 0 : index
    %c0_11 = arith.constant 0 : index
    %10 = vector.load %arg1[%c1_9, %c0_10, %c0_11] : memref<4x16x128xf32, #tpu.memory_space<vmem>>, vector<1x16x128xf32>
    %11 = vector.shape_cast %10 : vector<1x16x128xf32> to vector<16x128xf32>
    %12 = arith.truncf %11 : vector<16x128xf32> to vector<16x128xbf16>
    %c19 = arith.constant 19 : index
    %c0_12 = arith.constant 0 : index
    %13 = vector.load %arg9[%c19, %c0_12] : memref<72x128xbf16, #tpu.memory_space<vmem>>, vector<16x128xbf16>
    tpu.vector_store %arg9[%c19, %c0_12], %12 {strides = array<i32>} : memref<72x128xbf16, #tpu.memory_space<vmem>>, vector<16x128xbf16>,
    %c36 = arith.constant 36 : index
    %c0_13 = arith.constant 0 : index
    %14 = vector.load %arg9[%c36, %c0_13] : memref<72x128xbf16, #tpu.memory_space<vmem>>, vector<1x128xbf16>
    tpu.vector_store %arg9[%c36, %c0_13], %0 {strides = array<i32>} : memref<72x128xbf16, #tpu.memory_space<vmem>>, vector<1x128xbf16>,
    %c53 = arith.constant 53 : index
    %c0_14 = arith.constant 0 : index
    %15 = vector.load %arg9[%c53, %c0_14] : memref<72x128xbf16, #tpu.memory_space<vmem>>, vector<1x128xbf16>
    tpu.vector_store %arg9[%c53, %c0_14], %0 {strides = array<i32>} : memref<72x128xbf16, #tpu.memory_space<vmem>>, vector<1x128xbf16>,
    %c2 = arith.constant 2 : index
    %c0_15 = arith.constant 0 : index
    %c0_16 = arith.constant 0 : index
    %16 = vector.load %arg1[%c2, %c0_15, %c0_16] : memref<4x16x128xf32, #tpu.memory_space<vmem>>, vector<1x16x128xf32>
    %17 = vector.shape_cast %16 : vector<1x16x128xf32> to vector<16x128xf32>
    %18 = arith.truncf %17 : vector<16x128xf32> to vector<16x128xbf16>
    %c37 = arith.constant 37 : index
    %c0_17 = arith.constant 0 : index
    %19 = vector.load %arg9[%c37, %c0_17] : memref<72x128xbf16, #tpu.memory_space<vmem>>, vector<16x128xbf16>
    tpu.vector_store %arg9[%c37, %c0_17], %18 {strides = array<i32>} : memref<72x128xbf16, #tpu.memory_space<vmem>>, vector<16x128xbf16>,
    %c54 = arith.constant 54 : index
    %c0_18 = arith.constant 0 : index
    %20 = vector.load %arg9[%c54, %c0_18] : memref<72x128xbf16, #tpu.memory_space<vmem>>, vector<1x128xbf16>
    tpu.vector_store %arg9[%c54, %c0_18], %0 {strides = array<i32>} : memref<72x128xbf16, #tpu.memory_space<vmem>>, vector<1x128xbf16>,
    %c71 = arith.constant 71 : index
    %c0_19 = arith.constant 0 : index
    %21 = vector.load %arg9[%c71, %c0_19] : memref<72x128xbf16, #tpu.memory_space<vmem>>, vector<1x128xbf16>
    tpu.vector_store %arg9[%c71, %c0_19], %0 {strides = array<i32>} : memref<72x128xbf16, #tpu.memory_space<vmem>>, vector<1x128xbf16>,
    %c3 = arith.constant 3 : index
    %c0_20 = arith.constant 0 : index
    %c0_21 = arith.constant 0 : index
    %22 = vector.load %arg1[%c3, %c0_20, %c0_21] : memref<4x16x128xf32, #tpu.memory_space<vmem>>, vector<1x16x128xf32>
    %23 = vector.shape_cast %22 : vector<1x16x128xf32> to vector<16x128xf32>
    %24 = arith.truncf %23 : vector<16x128xf32> to vector<16x128xbf16>
    %c55 = arith.constant 55 : index
    %c0_22 = arith.constant 0 : index
    %25 = vector.load %arg9[%c55, %c0_22] : memref<72x128xbf16, #tpu.memory_space<vmem>>, vector<16x128xbf16>
    tpu.vector_store %arg9[%c55, %c0_22], %24 {strides = array<i32>} : memref<72x128xbf16, #tpu.memory_space<vmem>>, vector<16x128xbf16>,
    %cst_23 = arith.constant 0.000000e+00 : f32
    %26 = vector.broadcast %cst_23 : f32 to vector<70x128xf32>
    %c0_24 = arith.constant 0 : index
    %c0_25 = arith.constant 0 : index
    %27 = vector.load %arg9[%c0_24, %c0_25] : memref<72x128xbf16, #tpu.memory_space<vmem>>, vector<70x128xbf16>
    %c0_26 = arith.constant 0 : index
    %c0_27 = arith.constant 0 : index
    %c0_28 = arith.constant 0 : index
    %28 = vector.load %arg2[%c0_26, %c0_27, %c0_28] : memref<3x128x128xbf16, #tpu.memory_space<vmem>>, vector<1x128x128xbf16>
    %29 = vector.shape_cast %28 : vector<1x128x128xbf16> to vector<128x128xbf16>
    %cst_29 = arith.constant dense<0.000000e+00> : vector<70x128xf32>
    %30 = tpu.matmul %27, %29, %cst_29 {dimension_numbers = #tpu.dot_dimension_numbers<[1], [0], [0], [1], [0, 0, 1, 1], [], []>} : vector<70x128xbf16>, vector<128x128xbf16>, vector<70x128xf32> -> vector<70x128xf32>
    %31 = arith.addf %26, %30 : vector<70x128xf32>
    %c1_30 = arith.constant 1 : index
    %c0_31 = arith.constant 0 : index
    %32 = vector.load %arg9[%c1_30, %c0_31] : memref<72x128xbf16, #tpu.memory_space<vmem>>, vector<70x128xbf16>
    %c1_32 = arith.constant 1 : index
    %c0_33 = arith.constant 0 : index
    %c0_34 = arith.constant 0 : index
    %33 = vector.load %arg2[%c1_32, %c0_33, %c0_34] : memref<3x128x128xbf16, #tpu.memory_space<vmem>>, vector<1x128x128xbf16>
    %34 = vector.shape_cast %33 : vector<1x128x128xbf16> to vector<128x128xbf16>
    %cst_35 = arith.constant dense<0.000000e+00> : vector<70x128xf32>
    %35 = tpu.matmul %32, %34, %cst_35 {dimension_numbers = #tpu.dot_dimension_numbers<[1], [0], [0], [1], [0, 0, 1, 1], [], []>} : vector<70x128xbf16>, vector<128x128xbf16>, vector<70x128xf32> -> vector<70x128xf32>
    %36 = arith.addf %31, %35 : vector<70x128xf32>
    %c2_36 = arith.constant 2 : index
    %c0_37 = arith.constant 0 : index
    %37 = vector.load %arg9[%c2_36, %c0_37] : memref<72x128xbf16, #tpu.memory_space<vmem>>, vector<70x128xbf16>
    %c2_38 = arith.constant 2 : index
    %c0_39 = arith.constant 0 : index
    %c0_40 = arith.constant 0 : index
    %38 = vector.load %arg2[%c2_38, %c0_39, %c0_40] : memref<3x128x128xbf16, #tpu.memory_space<vmem>>, vector<1x128x128xbf16>
    %39 = vector.shape_cast %38 : vector<1x128x128xbf16> to vector<128x128xbf16>
    %cst_41 = arith.constant dense<0.000000e+00> : vector<70x128xf32>
    %40 = tpu.matmul %37, %39, %cst_41 {dimension_numbers = #tpu.dot_dimension_numbers<[1], [0], [0], [1], [0, 0, 1, 1], [], []>} : vector<70x128xbf16>, vector<128x128xbf16>, vector<70x128xf32> -> vector<70x128xf32>
    %41 = arith.addf %36, %40 : vector<70x128xf32>
    %c0_42 = arith.constant 0 : index
    %c0_43 = arith.constant 0 : index
    %42 = vector.load %arg3[%c0_42, %c0_43] : memref<1x128xf32, #tpu.memory_space<vmem>>, vector<1x128xf32>
    %43 = vector.broadcast %42 : vector<1x128xf32> to vector<70x128xf32>
    %44 = arith.mulf %41, %43 : vector<70x128xf32>
    %c0_44 = arith.constant 0 : index
    %c0_45 = arith.constant 0 : index
    %45 = vector.load %arg4[%c0_44, %c0_45] : memref<1x128xf32, #tpu.memory_space<vmem>>, vector<1x128xf32>
    %46 = vector.broadcast %45 : vector<1x128xf32> to vector<70x128xf32>
    %47 = arith.addf %44, %46 : vector<70x128xf32>
    %cst_46 = arith.constant 0.000000e+00 : f32
    %48 = vector.broadcast %cst_46 : f32 to vector<70x128xf32>
    %49 = arith.maximumf %47, %48 : vector<70x128xf32>
    %50 = arith.truncf %49 : vector<70x128xf32> to vector<70x128xbf16>
    %c1_47 = arith.constant 1 : index
    %c0_48 = arith.constant 0 : index
    %51 = vector.load %arg10[%c1_47, %c0_48] : memref<72x128xbf16, #tpu.memory_space<vmem>>, vector<70x128xbf16>
    tpu.vector_store %arg10[%c1_47, %c0_48], %50 {strides = array<i32>} : memref<72x128xbf16, #tpu.memory_space<vmem>>, vector<70x128xbf16>,
    %c0_49 = arith.constant 0 : index
    %c0_50 = arith.constant 0 : index
    %52 = vector.load %arg10[%c0_49, %c0_50] : memref<72x128xbf16, #tpu.memory_space<vmem>>, vector<1x128xbf16>
    tpu.vector_store %arg10[%c0_49, %c0_50], %1 {strides = array<i32>} : memref<72x128xbf16, #tpu.memory_space<vmem>>, vector<1x128xbf16>,
    %c17_51 = arith.constant 17 : index
    %c0_52 = arith.constant 0 : index
    %53 = vector.load %arg10[%c17_51, %c0_52] : memref<72x128xbf16, #tpu.memory_space<vmem>>, vector<1x128xbf16>
    tpu.vector_store %arg10[%c17_51, %c0_52], %1 {strides = array<i32>} : memref<72x128xbf16, #tpu.memory_space<vmem>>, vector<1x128xbf16>,
    %c18_53 = arith.constant 18 : index
    %c0_54 = arith.constant 0 : index
    %54 = vector.load %arg10[%c18_53, %c0_54] : memref<72x128xbf16, #tpu.memory_space<vmem>>, vector<1x128xbf16>
    tpu.vector_store %arg10[%c18_53, %c0_54], %1 {strides = array<i32>} : memref<72x128xbf16, #tpu.memory_space<vmem>>, vector<1x128xbf16>,
    %c35_55 = arith.constant 35 : index
    %c0_56 = arith.constant 0 : index
    %55 = vector.load %arg10[%c35_55, %c0_56] : memref<72x128xbf16, #tpu.memory_space<vmem>>, vector<1x128xbf16>
    tpu.vector_store %arg10[%c35_55, %c0_56], %1 {strides = array<i32>} : memref<72x128xbf16, #tpu.memory_space<vmem>>, vector<1x128xbf16>,
    %c36_57 = arith.constant 36 : index
    %c0_58 = arith.constant 0 : index
    %56 = vector.load %arg10[%c36_57, %c0_58] : memref<72x128xbf16, #tpu.memory_space<vmem>>, vector<1x128xbf16>
    tpu.vector_store %arg10[%c36_57, %c0_58], %1 {strides = array<i32>} : memref<72x128xbf16, #tpu.memory_space<vmem>>, vector<1x128xbf16>,
    %c53_59 = arith.constant 53 : index
    %c0_60 = arith.constant 0 : index
    %57 = vector.load %arg10[%c53_59, %c0_60] : memref<72x128xbf16, #tpu.memory_space<vmem>>, vector<1x128xbf16>
    tpu.vector_store %arg10[%c53_59, %c0_60], %1 {strides = array<i32>} : memref<72x128xbf16, #tpu.memory_space<vmem>>, vector<1x128xbf16>,
    %c54_61 = arith.constant 54 : index
    %c0_62 = arith.constant 0 : index
    %58 = vector.load %arg10[%c54_61, %c0_62] : memref<72x128xbf16, #tpu.memory_space<vmem>>, vector<1x128xbf16>
    tpu.vector_store %arg10[%c54_61, %c0_62], %1 {strides = array<i32>} : memref<72x128xbf16, #tpu.memory_space<vmem>>, vector<1x128xbf16>,
    %c71_63 = arith.constant 71 : index
    %c0_64 = arith.constant 0 : index
    %59 = vector.load %arg10[%c71_63, %c0_64] : memref<72x128xbf16, #tpu.memory_space<vmem>>, vector<1x128xbf16>
    tpu.vector_store %arg10[%c71_63, %c0_64], %1 {strides = array<i32>} : memref<72x128xbf16, #tpu.memory_space<vmem>>, vector<1x128xbf16>,
    %cst_65 = arith.constant 0.000000e+00 : f32
    %60 = vector.broadcast %cst_65 : f32 to vector<70x128xf32>
    %c0_66 = arith.constant 0 : index
    %c0_67 = arith.constant 0 : index
    %61 = vector.load %arg10[%c0_66, %c0_67] : memref<72x128xbf16, #tpu.memory_space<vmem>>, vector<70x128xbf16>
    %c0_68 = arith.constant 0 : index
    %c0_69 = arith.constant 0 : index
    %c0_70 = arith.constant 0 : index
    %62 = vector.load %arg5[%c0_68, %c0_69, %c0_70] : memref<3x128x128xbf16, #tpu.memory_space<vmem>>, vector<1x128x128xbf16>
    %63 = vector.shape_cast %62 : vector<1x128x128xbf16> to vector<128x128xbf16>
    %cst_71 = arith.constant dense<0.000000e+00> : vector<70x128xf32>
    %64 = tpu.matmul %61, %63, %cst_71 {dimension_numbers = #tpu.dot_dimension_numbers<[1], [0], [0], [1], [0, 0, 1, 1], [], []>} : vector<70x128xbf16>, vector<128x128xbf16>, vector<70x128xf32> -> vector<70x128xf32>
    %65 = arith.addf %60, %64 : vector<70x128xf32>
    %c1_72 = arith.constant 1 : index
    %c0_73 = arith.constant 0 : index
    %66 = vector.load %arg10[%c1_72, %c0_73] : memref<72x128xbf16, #tpu.memory_space<vmem>>, vector<70x128xbf16>
    %c1_74 = arith.constant 1 : index
    %c0_75 = arith.constant 0 : index
    %c0_76 = arith.constant 0 : index
    %67 = vector.load %arg5[%c1_74, %c0_75, %c0_76] : memref<3x128x128xbf16, #tpu.memory_space<vmem>>, vector<1x128x128xbf16>
    %68 = vector.shape_cast %67 : vector<1x128x128xbf16> to vector<128x128xbf16>
    %cst_77 = arith.constant dense<0.000000e+00> : vector<70x128xf32>
    %69 = tpu.matmul %66, %68, %cst_77 {dimension_numbers = #tpu.dot_dimension_numbers<[1], [0], [0], [1], [0, 0, 1, 1], [], []>} : vector<70x128xbf16>, vector<128x128xbf16>, vector<70x128xf32> -> vector<70x128xf32>
    %70 = arith.addf %65, %69 : vector<70x128xf32>
    %c2_78 = arith.constant 2 : index
    %c0_79 = arith.constant 0 : index
    %71 = vector.load %arg10[%c2_78, %c0_79] : memref<72x128xbf16, #tpu.memory_space<vmem>>, vector<70x128xbf16>
    %c2_80 = arith.constant 2 : index
    %c0_81 = arith.constant 0 : index
    %c0_82 = arith.constant 0 : index
    %72 = vector.load %arg5[%c2_80, %c0_81, %c0_82] : memref<3x128x128xbf16, #tpu.memory_space<vmem>>, vector<1x128x128xbf16>
    %73 = vector.shape_cast %72 : vector<1x128x128xbf16> to vector<128x128xbf16>
    %cst_83 = arith.constant dense<0.000000e+00> : vector<70x128xf32>
    %74 = tpu.matmul %71, %73, %cst_83 {dimension_numbers = #tpu.dot_dimension_numbers<[1], [0], [0], [1], [0, 0, 1, 1], [], []>} : vector<70x128xbf16>, vector<128x128xbf16>, vector<70x128xf32> -> vector<70x128xf32>
    %75 = arith.addf %70, %74 : vector<70x128xf32>
    %76 = vector.extract_strided_slice %75 {offsets = [0, 0], sizes = [16, 128], strides = [1, 1]} : vector<70x128xf32> to vector<16x128xf32>
    %c0_84 = arith.constant 0 : index
    %c0_85 = arith.constant 0 : index
    %77 = vector.load %arg6[%c0_84, %c0_85] : memref<1x128xf32, #tpu.memory_space<vmem>>, vector<1x128xf32>
    %78 = vector.broadcast %77 : vector<1x128xf32> to vector<16x128xf32>
    %79 = arith.mulf %76, %78 : vector<16x128xf32>
    %c0_86 = arith.constant 0 : index
    %c0_87 = arith.constant 0 : index
    %80 = vector.load %arg7[%c0_86, %c0_87] : memref<1x128xf32, #tpu.memory_space<vmem>>, vector<1x128xf32>
    %81 = vector.broadcast %80 : vector<1x128xf32> to vector<16x128xf32>
    %82 = arith.addf %79, %81 : vector<16x128xf32>
    %c0_88 = arith.constant 0 : index
    %c0_89 = arith.constant 0 : index
    %c0_90 = arith.constant 0 : index
    %83 = vector.load %arg1[%c0_88, %c0_89, %c0_90] : memref<4x16x128xf32, #tpu.memory_space<vmem>>, vector<1x16x128xf32>
    %84 = vector.shape_cast %83 : vector<1x16x128xf32> to vector<16x128xf32>
    %85 = arith.addf %82, %84 : vector<16x128xf32>
    %cst_91 = arith.constant 0.000000e+00 : f32
    %86 = vector.broadcast %cst_91 : f32 to vector<16x128xf32>
    %87 = arith.maximumf %85, %86 : vector<16x128xf32>
    %c0_92 = arith.constant 0 : index
    %c0_93 = arith.constant 0 : index
    %c0_94 = arith.constant 0 : index
    %88 = vector.load %arg8[%c0_92, %c0_93, %c0_94] : memref<4x16x128xf32, #tpu.memory_space<vmem>>, vector<1x16x128xf32>
    %89 = vector.shape_cast %88 : vector<1x16x128xf32> to vector<16x128xf32>
    %90 = vector.shape_cast %87 : vector<16x128xf32> to vector<1x16x128xf32>
    tpu.vector_store %arg8[%c0_92, %c0_93, %c0_94], %90 {strides = array<i32>} : memref<4x16x128xf32, #tpu.memory_space<vmem>>, vector<1x16x128xf32>,
    %91 = vector.extract_strided_slice %75 {offsets = [18, 0], sizes = [16, 128], strides = [1, 1]} : vector<70x128xf32> to vector<16x128xf32>
    %c0_95 = arith.constant 0 : index
    %c0_96 = arith.constant 0 : index
    %92 = vector.load %arg6[%c0_95, %c0_96] : memref<1x128xf32, #tpu.memory_space<vmem>>, vector<1x128xf32>
    %93 = vector.broadcast %92 : vector<1x128xf32> to vector<16x128xf32>
    %94 = arith.mulf %91, %93 : vector<16x128xf32>
    %c0_97 = arith.constant 0 : index
    %c0_98 = arith.constant 0 : index
    %95 = vector.load %arg7[%c0_97, %c0_98] : memref<1x128xf32, #tpu.memory_space<vmem>>, vector<1x128xf32>
    %96 = vector.broadcast %95 : vector<1x128xf32> to vector<16x128xf32>
    %97 = arith.addf %94, %96 : vector<16x128xf32>
    %c1_99 = arith.constant 1 : index
    %c0_100 = arith.constant 0 : index
    %c0_101 = arith.constant 0 : index
    %98 = vector.load %arg1[%c1_99, %c0_100, %c0_101] : memref<4x16x128xf32, #tpu.memory_space<vmem>>, vector<1x16x128xf32>
    %99 = vector.shape_cast %98 : vector<1x16x128xf32> to vector<16x128xf32>
    %100 = arith.addf %97, %99 : vector<16x128xf32>
    %cst_102 = arith.constant 0.000000e+00 : f32
    %101 = vector.broadcast %cst_102 : f32 to vector<16x128xf32>
    %102 = arith.maximumf %100, %101 : vector<16x128xf32>
    %c1_103 = arith.constant 1 : index
    %c0_104 = arith.constant 0 : index
    %c0_105 = arith.constant 0 : index
    %103 = vector.load %arg8[%c1_103, %c0_104, %c0_105] : memref<4x16x128xf32, #tpu.memory_space<vmem>>, vector<1x16x128xf32>
    %104 = vector.shape_cast %103 : vector<1x16x128xf32> to vector<16x128xf32>
    %105 = vector.shape_cast %102 : vector<16x128xf32> to vector<1x16x128xf32>
    tpu.vector_store %arg8[%c1_103, %c0_104, %c0_105], %105 {strides = array<i32>} : memref<4x16x128xf32, #tpu.memory_space<vmem>>, vector<1x16x128xf32>,
    %106 = vector.extract_strided_slice %75 {offsets = [36, 0], sizes = [16, 128], strides = [1, 1]} : vector<70x128xf32> to vector<16x128xf32>
    %c0_106 = arith.constant 0 : index
    %c0_107 = arith.constant 0 : index
    %107 = vector.load %arg6[%c0_106, %c0_107] : memref<1x128xf32, #tpu.memory_space<vmem>>, vector<1x128xf32>
    %108 = vector.broadcast %107 : vector<1x128xf32> to vector<16x128xf32>
    %109 = arith.mulf %106, %108 : vector<16x128xf32>
    %c0_108 = arith.constant 0 : index
    %c0_109 = arith.constant 0 : index
    %110 = vector.load %arg7[%c0_108, %c0_109] : memref<1x128xf32, #tpu.memory_space<vmem>>, vector<1x128xf32>
    %111 = vector.broadcast %110 : vector<1x128xf32> to vector<16x128xf32>
    %112 = arith.addf %109, %111 : vector<16x128xf32>
    %c2_110 = arith.constant 2 : index
    %c0_111 = arith.constant 0 : index
    %c0_112 = arith.constant 0 : index
    %113 = vector.load %arg1[%c2_110, %c0_111, %c0_112] : memref<4x16x128xf32, #tpu.memory_space<vmem>>, vector<1x16x128xf32>
    %114 = vector.shape_cast %113 : vector<1x16x128xf32> to vector<16x128xf32>
    %115 = arith.addf %112, %114 : vector<16x128xf32>
    %cst_113 = arith.constant 0.000000e+00 : f32
    %116 = vector.broadcast %cst_113 : f32 to vector<16x128xf32>
    %117 = arith.maximumf %115, %116 : vector<16x128xf32>
    %c2_114 = arith.constant 2 : index
    %c0_115 = arith.constant 0 : index
    %c0_116 = arith.constant 0 : index
    %118 = vector.load %arg8[%c2_114, %c0_115, %c0_116] : memref<4x16x128xf32, #tpu.memory_space<vmem>>, vector<1x16x128xf32>
    %119 = vector.shape_cast %118 : vector<1x16x128xf32> to vector<16x128xf32>
    %120 = vector.shape_cast %117 : vector<16x128xf32> to vector<1x16x128xf32>
    tpu.vector_store %arg8[%c2_114, %c0_115, %c0_116], %120 {strides = array<i32>} : memref<4x16x128xf32, #tpu.memory_space<vmem>>, vector<1x16x128xf32>,
    %121 = vector.extract_strided_slice %75 {offsets = [54, 0], sizes = [16, 128], strides = [1, 1]} : vector<70x128xf32> to vector<16x128xf32>
    %c0_117 = arith.constant 0 : index
    %c0_118 = arith.constant 0 : index
    %122 = vector.load %arg6[%c0_117, %c0_118] : memref<1x128xf32, #tpu.memory_space<vmem>>, vector<1x128xf32>
    %123 = vector.broadcast %122 : vector<1x128xf32> to vector<16x128xf32>
    %124 = arith.mulf %121, %123 : vector<16x128xf32>
    %c0_119 = arith.constant 0 : index
    %c0_120 = arith.constant 0 : index
    %125 = vector.load %arg7[%c0_119, %c0_120] : memref<1x128xf32, #tpu.memory_space<vmem>>, vector<1x128xf32>
    %126 = vector.broadcast %125 : vector<1x128xf32> to vector<16x128xf32>
    %127 = arith.addf %124, %126 : vector<16x128xf32>
    %c3_121 = arith.constant 3 : index
    %c0_122 = arith.constant 0 : index
    %c0_123 = arith.constant 0 : index
    %128 = vector.load %arg1[%c3_121, %c0_122, %c0_123] : memref<4x16x128xf32, #tpu.memory_space<vmem>>, vector<1x16x128xf32>
    %129 = vector.shape_cast %128 : vector<1x16x128xf32> to vector<16x128xf32>
    %130 = arith.addf %127, %129 : vector<16x128xf32>
    %cst_124 = arith.constant 0.000000e+00 : f32
    %131 = vector.broadcast %cst_124 : f32 to vector<16x128xf32>
    %132 = arith.maximumf %130, %131 : vector<16x128xf32>
    %c3_125 = arith.constant 3 : index
    %c0_126 = arith.constant 0 : index
    %c0_127 = arith.constant 0 : index
    %133 = vector.load %arg8[%c3_125, %c0_126, %c0_127] : memref<4x16x128xf32, #tpu.memory_space<vmem>>, vector<1x16x128xf32>
    %134 = vector.shape_cast %133 : vector<1x16x128xf32> to vector<16x128xf32>
    %135 = vector.shape_cast %132 : vector<16x128xf32> to vector<1x16x128xf32>
    tpu.vector_store %arg8[%c3_125, %c0_126, %c0_127], %135 {strides = array<i32>} : memref<4x16x128xf32, #tpu.memory_space<vmem>>, vector<1x16x128xf32>,
    return
  }
  func.func @transform_0(%arg0: i32) -> (i32, i32, i32) {
    %c0_i32 = arith.constant 0 : i32
    %c0_i32_0 = arith.constant 0 : i32
    %c0_i32_1 = arith.constant 0 : i32
    return %arg0, %c0_i32, %c0_i32_0 : i32, i32, i32
  }
  func.func @transform_1(%arg0: i32) -> (i32, i32, i32) {
    %c0_i32 = arith.constant 0 : i32
    %c0_i32_0 = arith.constant 0 : i32
    %c0_i32_1 = arith.constant 0 : i32
    %c0_i32_2 = arith.constant 0 : i32
    return %c0_i32, %c0_i32_0, %c0_i32_1 : i32, i32, i32
  }
  func.func @transform_2(%arg0: i32) -> (i32, i32) {
    %c0_i32 = arith.constant 0 : i32
    %c0_i32_0 = arith.constant 0 : i32
    %c0_i32_1 = arith.constant 0 : i32
    return %c0_i32, %c0_i32_0 : i32, i32
  }
  func.func @transform_3(%arg0: i32) -> (i32, i32) {
    %c0_i32 = arith.constant 0 : i32
    %c0_i32_0 = arith.constant 0 : i32
    %c0_i32_1 = arith.constant 0 : i32
    return %c0_i32, %c0_i32_0 : i32, i32
  }
  func.func @transform_4(%arg0: i32) -> (i32, i32, i32) {
    %c0_i32 = arith.constant 0 : i32
    %c0_i32_0 = arith.constant 0 : i32
    %c0_i32_1 = arith.constant 0 : i32
    %c0_i32_2 = arith.constant 0 : i32
    return %c0_i32, %c0_i32_0, %c0_i32_1 : i32, i32, i32
  }
  func.func @transform_5(%arg0: i32) -> (i32, i32) {
    %c0_i32 = arith.constant 0 : i32
    %c0_i32_0 = arith.constant 0 : i32
    %c0_i32_1 = arith.constant 0 : i32
    return %c0_i32, %c0_i32_0 : i32, i32
  }
  func.func @transform_6(%arg0: i32) -> (i32, i32) {
    %c0_i32 = arith.constant 0 : i32
    %c0_i32_0 = arith.constant 0 : i32
    %c0_i32_1 = arith.constant 0 : i32
    return %c0_i32, %c0_i32_0 : i32, i32
  }
  func.func @transform_7(%arg0: i32) -> (i32, i32, i32) {
    %c0_i32 = arith.constant 0 : i32
    %c0_i32_0 = arith.constant 0 : i32
    %c0_i32_1 = arith.constant 0 : i32
    return %arg0, %c0_i32, %c0_i32_0 : i32, i32, i32
  }
}

</mosaic_0001>

<llo_original>
// kernel: tile.23
$region0: #{tile.23}
  #allocation0 [shape = 's32[1]{0}', space=sflag, size = 0x4, scoped, tag = 'scoped memory for tile.23']
  %s0 = inlined_call_operand.vmem [shape: f32[8], index: 0, kind: input, shape index: {}]
  %s1 = inlined_call_operand.vmem [shape: f32[16,8], index: 1, kind: output, shape index: {}]
  // Predicated region
  $region2: #{tile.23} parent=0 // pred_check
    _
  $region3: #{tile.23} parent=0 // pred_check_branch
    %3 = sbr.rel (0) target = $region5
  $region4: #{tile.23} parent=0 // pred_region
    _
  $region5: #{tile.23} parent=0 // pred_fallthru
    _
  %v4 = vld [vmem:[%s0] ss:$0 sm:$0xff]
  %5 = vst [vmem:[%s1] sm:$0xff] %v4
  %s6 = scalar_lea.vmem %s1, 8
  %7 = vst [vmem:[%s6] sm:$0xff] %v4

// kernel: tile.24
$region0: #{tile.24}
  %s0 = inlined_call_operand.vmem [shape: f32[16,8], index: 0, kind: input, shape index: {}]
  %s1 = inlined_call_operand.vmem [shape: f32[1,128], index: 1, kind: output, shape index: {}]
  $region1: #{tile.24} parent=0
    #allocation0 [shape = 'u8[4096]{0}', space=vmem, size = 0x1000, scoped, tag = 'scoped mem for output reshape']
    %v2 = vld [vmem:[%s0] sm:$0x1]
    %vm3 = vcmask 64512
    %4 = vst.msk [vmem:[#allocation0] sm:$0x1] %vm3, %v2
    %s5 = scalar_lea.vmem %s0, 15
    %v6 = vld [vmem:[%s5] sm:$0x1]
    %7 = vrot.lane.b32.xlu0 %v6, 120
    %v8 = vpop.permute.xlu0 %7
    %vm9 = vcmask 1048512
    %10 = vst.msk [vmem:[#allocation0] sm:$0x1] %vm9, %v8
    %s11 = scalar_lea.vmem %s0, 14
    %v12 = vld [vmem:[%s11] sm:$0x1]
    %13 = vrot.lane.b32.xlu0 %v12, 112
    %v14 = vpop.permute.xlu0 %13
    %vm15 = vcmask 982912
    %16 = vst.msk [vmem:[#allocation0] sm:$0x1] %vm15, %v14
    %s17 = scalar_lea.vmem %s0, 13
    %v18 = vld [vmem:[%s17] sm:$0x1]
    %19 = vrot.lane.b32.xlu0 %v18, 104
    %v20 = vpop.permute.xlu0 %19
    %vm21 = vcmask 917312
    %22 = vst.msk [vmem:[#allocation0] sm:$0x1] %vm21, %v20
    %s23 = scalar_lea.vmem %s0, 12
    %v24 = vld [vmem:[%s23] sm:$0x1]
    %25 = vrot.lane.b32.xlu0 %v24, 96
    %v26 = vpop.permute.xlu0 %25
    %vm27 = vcmask 851712
    %28 = vst.msk [vmem:[#allocation0] sm:$0x1] %vm27, %v26
    %s29 = scalar_lea.vmem %s0, 11
    %v30 = vld [vmem:[%s29] sm:$0x1]
    %31 = vrot.lane.b32.xlu0 %v30, 88
    %v32 = vpop.permute.xlu0 %31
    %vm33 = vcmask 786112
    %34 = vst.msk [vmem:[#allocation0] sm:$0x1] %vm33, %v32
    %s35 = scalar_lea.vmem %s0, 10
    %v36 = vld [vmem:[%s35] sm:$0x1]
    %37 = vrot.lane.b32.xlu0 %v36, 80
    %v38 = vpop.permute.xlu0 %37
    %vm39 = vcmask 720512
    %40 = vst.msk [vmem:[#allocation0] sm:$0x1] %vm39, %v38
    %s41 = scalar_lea.vmem %s0, 9
    %v42 = vld [vmem:[%s41] sm:$0x1]
    %43 = vrot.lane.b32.xlu0 %v42, 72
    %v44 = vpop.permute.xlu0 %43
    %vm45 = vcmask 654912
    %46 = vst.msk [vmem:[#allocation0] sm:$0x1] %vm45, %v44
    %s47 = scalar_lea.vmem %s0, 8
    %v48 = vld [vmem:[%s47] sm:$0x1]
    %49 = vrot.lane.b32.xlu0 %v48, 64
    %v50 = vpop.permute.xlu0 %49
    %vm51 = vcmask 589312
    %52 = vst.msk [vmem:[#allocation0] sm:$0x1] %vm51, %v50
    %s53 = scalar_lea.vmem %s0, 7
    %v54 = vld [vmem:[%s53] sm:$0x1]
    %55 = vrot.lane.b32.xlu0 %v54, 56
    %v56 = vpop.permute.xlu0 %55
    %vm57 = vcmask 523712
    %58 = vst.msk [vmem:[#allocation0] sm:$0x1] %vm57, %v56
    %s59 = scalar_lea.vmem %s0, 6
    %v60 = vld [vmem:[%s59] sm:$0x1]
    %61 = vrot.lane.b32.xlu0 %v60, 48
    %v62 = vpop.permute.xlu0 %61
    %vm63 = vcmask 458112
    %64 = vst.msk [vmem:[#allocation0] sm:$0x1] %vm63, %v62
    %s65 = scalar_lea.vmem %s0, 5
    %v66 = vld [vmem:[%s65] sm:$0x1]
    %67 = vrot.lane.b32.xlu0 %v66, 40
    %v68 = vpop.permute.xlu0 %67
    %vm69 = vcmask 392512
    %70 = vst.msk [vmem:[#allocation0] sm:$0x1] %vm69, %v68
    %s71 = scalar_lea.vmem %s0, 4
    %v72 = vld [vmem:[%s71] sm:$0x1]
    %73 = vrot.lane.b32.xlu0 %v72, 32
    %v74 = vpop.permute.xlu0 %73
    %vm75 = vcmask 326912
    %76 = vst.msk [vmem:[#allocation0] sm:$0x1] %vm75, %v74
    %s77 = scalar_lea.vmem %s0, 3
    %v78 = vld [vmem:[%s77] sm:$0x1]
    %79 = vrot.lane.b32.xlu0 %v78, 24
    %v80 = vpop.permute.xlu0 %79
    %vm81 = vcmask 261312
    %82 = vst.msk [vmem:[#allocation0] sm:$0x1] %vm81, %v80
    %s83 = scalar_lea.vmem %s0, 2
    %v84 = vld [vmem:[%s83] sm:$0x1]
    %85 = vrot.lane.b32.xlu0 %v84, 16
    %v86 = vpop.permute.xlu0 %85
    %vm87 = vcmask 195712
    %88 = vst.msk [vmem:[#allocation0] sm:$0x1] %vm87, %v86
    %s89 = scalar_lea.vmem %s0, 1
    %v90 = vld [vmem:[%s89] sm:$0x1]
    %91 = vrot.lane.b32.xlu0 %v90, 8
    %v92 = vpop.permute.xlu0 %91
    %vm93 = vcmask 130112
    %94 = vst.msk [vmem:[#allocation0] sm:$0x1] %vm93, %v92
    %s96 = ssub.s32 2, 1
    %v97 = vld [vmem:[#allocation0] sm:%s96]
    %s99 = ssub.s32 2, 1
    %100 = vst [vmem:[%s1] sm:%s99] %v97

// kernel: basic_block.1
$region0: #{basic_block.1}
  #allocation0 [shape = 'u32[]', space=smem, size = 0x4, offset = 0x4, fixed_abs, tag = 'smem constant byte address 0x4 - core index']
  #allocation1 [shape = 'u32[72,128]{1,0:T(1,128)}', space=vmem, size = 0x9000, scoped, tag = 'internal scratch']
  #allocation2 [shape = 'bf16[72,128]{1,0:T(8,128)(2,1)}', space=vmem, size = 0x4800, scoped, tag = 'scratch operand']
  #allocation3 [shape = 'bf16[72,128]{1,0:T(8,128)(2,1)}', space=vmem, size = 0x4800, scoped, tag = 'scratch operand']
  %s0 = inlined_call_operand.vmem [shape: f32[8,16,128], index: 0, kind: input, shape index: {}]
  %s1 = inlined_call_operand.vmem [shape: bf16[3,128,128], index: 1, kind: input, shape index: {}]
  %s2 = inlined_call_operand.vmem [shape: f32[1,128], index: 2, kind: input, shape index: {}]
  %s3 = inlined_call_operand.vmem [shape: f32[1,128], index: 3, kind: input, shape index: {}]
  %s4 = inlined_call_operand.vmem [shape: bf16[3,128,128], index: 4, kind: input, shape index: {}]
  %s5 = inlined_call_operand.vmem [shape: f32[1,128], index: 5, kind: input, shape index: {}]
  %s6 = inlined_call_operand.vmem [shape: f32[1,128], index: 6, kind: input, shape index: {}]
  %s7 = inlined_call_operand.vmem [shape: f32[8,16,128], index: 7, kind: output, shape index: {}]
  %s8 = sld [smem:[#allocation0]]
  $region61: #{basic_block.1} parent=0
    _
  %s10 = ssub.s32 1, %s8
  %s11 = scalar_select 0, %s10, %s8
  loop: start=0, step=1, limit=4
  $region2: #{basic_block.1} parent=0 // loop_pre_header
    _
  $region3: #{basic_block.1} parent=0 // loop_header
    %s13 = sphi 0, %s17
    %p14 = scmp.ge.s32.totalorder %s13, 4
    %s23 = sphi 0, %s25
    %s26 = sphi 0, %s23
    %s27 = sphi 0, %s26
    %s43 = sphi 0, %s27
    %s47 = sphi 0, %s47
    %s49 = sphi 0, %s47
    %s50 = sphi 0, %s49
    %s64 = sphi 0, %s50
    %s68 = sphi 0, %s68
    %s70 = sphi 0, %s68
    %s71 = sphi 0, %s70
    %s85 = sphi 0, %s71
    %s89 = sphi 0, %s89
    %s91 = sphi 0, %s89
    %s92 = sphi 0, %s91
    %s106 = sphi 0, %s92
    %s110 = sphi 0, %s110
    %s112 = sphi 0, %s110
    %s113 = sphi 0, %s112
    %s127 = sphi 0, %s113
    %s131 = sphi 0, %s131
    %s133 = sphi 0, %s131
    %s134 = sphi 0, %s133
    %s148 = sphi 0, %s134
    %s152 = sphi 0, %s152
    %s154 = sphi 0, %s152
    %s155 = sphi 0, %s154
    %s169 = sphi 0, %s155
    %s175 = sphi 0, %s177
    %s178 = sphi 0, %s175
    %s179 = sphi 0, %s178
    %s195 = sphi 0, %s179
  $region4: #{basic_block.1} parent=0 // loop_header_branch
    %16 = sbr.rel (%p14) target = $region8
  $region5: #{basic_block.1} parent=0 // loop_body
    %s18 = ssub.s32 %s13, 1
    %s19 = ssub.s32 %s13, 2
    %s20 = sadd.s32 %s13, 1
    %s21 = ssub.s32 %s13, %s20
    %p22 = scmp.eq.s32.totalorder %s21, 0
    %s24 = sadd.s32 %s23, 1
    %s25 = scalar_select %p22, %s23, %s24
    %p28 = pneg %p22
    %p29 = scmp.eq.s32.totalorder %s13, 1
    %p30 = por %p28, %p29
    %p31 = scmp.ne.s32.totalorder %s23, %s26
    %p32 = scmp.eq.s32.totalorder %s13, 0
    %p33 = por %p31, %p32
    %p34 = scmp.ne.s32.totalorder %s23, %s26
    %p35 = scmp.eq.s32.totalorder %s18, 1
    %p36 = por %p34, %p35
    %p37 = scmp.ne.s32.totalorder %s26, %s27
    %p38 = scmp.eq.s32.totalorder %s18, 0
    %p39 = por %p37, %p38
    %p40 = scmp.ne.s32.totalorder %s26, %s27
    %p41 = scmp.eq.s32.totalorder %s19, 1
    %p42 = por %p40, %p41
    %p44 = scmp.ne.s32.totalorder %s27, %s43
    %p45 = scmp.eq.s32.totalorder %s19, 0
    %p46 = por %p44, %p45
    %s48 = sadd.s32 %s47, 1
    %p51 = scmp.eq.s32.totalorder %s13, 1
    %p52 = scmp.ne.s32.totalorder %s47, %s49
    %p53 = scmp.eq.s32.totalorder %s13, 0
    %p54 = por %p52, %p53
    %p55 = scmp.ne.s32.totalorder %s47, %s49
    %p56 = scmp.eq.s32.totalorder %s18, 1
    %p57 = por %p55, %p56
    %p58 = scmp.ne.s32.totalorder %s49, %s50
    %p59 = scmp.eq.s32.totalorder %s18, 0
    %p60 = por %p58, %p59
    %p61 = scmp.ne.s32.totalorder %s49, %s50
    %p62 = scmp.eq.s32.totalorder %s19, 1
    %p63 = por %p61, %p62
    %p65 = scmp.ne.s32.totalorder %s50, %s64
    %p66 = scmp.eq.s32.totalorder %s19, 0
    %p67 = por %p65, %p66
    %s69 = sadd.s32 %s68, 1
    %p72 = scmp.eq.s32.totalorder %s13, 1
    %p73 = scmp.ne.s32.totalorder %s68, %s70
    %p74 = scmp.eq.s32.totalorder %s13, 0
    %p75 = por %p73, %p74
    %p76 = scmp.ne.s32.totalorder %s68, %s70
    %p77 = scmp.eq.s32.totalorder %s18, 1
    %p78 = por %p76, %p77
    %p79 = scmp.ne.s32.totalorder %s70, %s71
    %p80 = scmp.eq.s32.totalorder %s18, 0
    %p81 = por %p79, %p80
    %p82 = scmp.ne.s32.totalorder %s70, %s71
    %p83 = scmp.eq.s32.totalorder %s19, 1
    %p84 = por %p82, %p83
    %p86 = scmp.ne.s32.totalorder %s71, %s85
    %p87 = scmp.eq.s32.totalorder %s19, 0
    %p88 = por %p86, %p87
    %s90 = sadd.s32 %s89, 1
    %p93 = scmp.eq.s32.totalorder %s13, 1
    %p94 = scmp.ne.s32.totalorder %s89, %s91
    %p95 = scmp.eq.s32.totalorder %s13, 0
    %p96 = por %p94, %p95
    %p97 = scmp.ne.s32.totalorder %s89, %s91
    %p98 = scmp.eq.s32.totalorder %s18, 1
    %p99 = por %p97, %p98
    %p100 = scmp.ne.s32.totalorder %s91, %s92
    %p101 = scmp.eq.s32.totalorder %s18, 0
    %p102 = por %p100, %p101
    %p103 = scmp.ne.s32.totalorder %s91, %s92
    %p104 = scmp.eq.s32.totalorder %s19, 1
    %p105 = por %p103, %p104
    %p107 = scmp.ne.s32.totalorder %s92, %s106
    %p108 = scmp.eq.s32.totalorder %s19, 0
    %p109 = por %p107, %p108
    %s111 = sadd.s32 %s110, 1
    %p114 = scmp.eq.s32.totalorder %s13, 1
    %p115 = scmp.ne.s32.totalorder %s110, %s112
    %p116 = scmp.eq.s32.totalorder %s13, 0
    %p117 = por %p115, %p116
    %p118 = scmp.ne.s32.totalorder %s110, %s112
    %p119 = scmp.eq.s32.totalorder %s18, 1
    %p120 = por %p118, %p119
    %p121 = scmp.ne.s32.totalorder %s112, %s113
    %p122 = scmp.eq.s32.totalorder %s18, 0
    %p123 = por %p121, %p122
    %p124 = scmp.ne.s32.totalorder %s112, %s113
    %p125 = scmp.eq.s32.totalorder %s19, 1
    %p126 = por %p124, %p125
    %p128 = scmp.ne.s32.totalorder %s113, %s127
    %p129 = scmp.eq.s32.totalorder %s19, 0
    %p130 = por %p128, %p129
    %s132 = sadd.s32 %s131, 1
    %p135 = scmp.eq.s32.totalorder %s13, 1
    %p136 = scmp.ne.s32.totalorder %s131, %s133
    %p137 = scmp.eq.s32.totalorder %s13, 0
    %p138 = por %p136, %p137
    %p139 = scmp.ne.s32.totalorder %s131, %s133
    %p140 = scmp.eq.s32.totalorder %s18, 1
    %p141 = por %p139, %p140
    %p142 = scmp.ne.s32.totalorder %s133, %s134
    %p143 = scmp.eq.s32.totalorder %s18, 0
    %p144 = por %p142, %p143
    %p145 = scmp.ne.s32.totalorder %s133, %s134
    %p146 = scmp.eq.s32.totalorder %s19, 1
    %p147 = por %p145, %p146
    %p149 = scmp.ne.s32.totalorder %s134, %s148
    %p150 = scmp.eq.s32.totalorder %s19, 0
    %p151 = por %p149, %p150
    %s153 = sadd.s32 %s152, 1
    %p156 = scmp.eq.s32.totalorder %s13, 1
    %p157 = scmp.ne.s32.totalorder %s152, %s154
    %p158 = scmp.eq.s32.totalorder %s13, 0
    %p159 = por %p157, %p158
    %p160 = scmp.ne.s32.totalorder %s152, %s154
    %p161 = scmp.eq.s32.totalorder %s18, 1
    %p162 = por %p160, %p161
    %p163 = scmp.ne.s32.totalorder %s154, %s155
    %p164 = scmp.eq.s32.totalorder %s18, 0
    %p165 = por %p163, %p164
    %p166 = scmp.ne.s32.totalorder %s154, %s155
    %p167 = scmp.eq.s32.totalorder %s19, 1
    %p168 = por %p166, %p167
    %p170 = scmp.ne.s32.totalorder %s155, %s169
    %p171 = scmp.eq.s32.totalorder %s19, 0
    %p172 = por %p170, %p171
    %s173 = ssub.s32 %s13, %s20
    %p174 = scmp.eq.s32.totalorder %s173, 0
    %s176 = sadd.s32 %s175, 1
    %s177 = scalar_select %p174, %s175, %s176
    %p180 = pneg %p174
    %p181 = scmp.eq.s32.totalorder %s13, 1
    %p182 = por %p180, %p181
    %p183 = scmp.ne.s32.totalorder %s175, %s178
    %p184 = scmp.eq.s32.totalorder %s13, 0
    %p185 = por %p183, %p184
    %p186 = scmp.ne.s32.totalorder %s175, %s178
    %p187 = scmp.eq.s32.totalorder %s18, 1
    %p188 = por %p186, %p187
    %p189 = scmp.ne.s32.totalorder %s178, %s179
    %p190 = scmp.eq.s32.totalorder %s18, 0
    %p191 = por %p189, %p190
    %p192 = scmp.ne.s32.totalorder %s178, %s179
    %p193 = scmp.eq.s32.totalorder %s19, 1
    %p194 = por %p192, %p193
    %p196 = scmp.ne.s32.totalorder %s179, %s195
    %p197 = scmp.eq.s32.totalorder %s19, 0
    %p198 = por %p196, %p197
    %p199 = scmp.le.s32.totalorder 1, %s13
    %p200 = scmp.lt.s32.totalorder %s13, 3
    %p201 = pnand %p199, %p200
    %p202 = pneg %p201
    // Predicated region
    $region9: #{basic_block.1} parent=5 // pred_check
      _
    $region10: #{basic_block.1} parent=5 // pred_check_branch
      %204 = sbr.rel (%p201) target = $region12
    $region11: #{basic_block.1} parent=5 // pred_region
      %s205 = ssub.s32 %s13, 1
      // Predicated region
      $region13: #{basic_block.1} parent=11 // pred_check
        %p206 = pneg %p60
      $region14: #{basic_block.1} parent=11 // pred_check_branch
        %208 = sbr.rel (%p206) target = $region16
      $region15: #{basic_block.1} parent=11 // pred_region
        _
      $region16: #{basic_block.1} parent=11 // pred_fallthru
        _
      // Predicated region
      $region17: #{basic_block.1} parent=11 // pred_check
        %p209 = pneg %p81
      $region18: #{basic_block.1} parent=11 // pred_check_branch
        %211 = sbr.rel (%p209) target = $region20
      $region19: #{basic_block.1} parent=11 // pred_region
        _
      $region20: #{basic_block.1} parent=11 // pred_fallthru
        _
      // Predicated region
      $region21: #{basic_block.1} parent=11 // pred_check
        %p212 = pneg %p102
      $region22: #{basic_block.1} parent=11 // pred_check_branch
        %214 = sbr.rel (%p212) target = $region24
      $region23: #{basic_block.1} parent=11 // pred_region
        _
      $region24: #{basic_block.1} parent=11 // pred_fallthru
        _
      // Predicated region
      $region25: #{basic_block.1} parent=11 // pred_check
        %p215 = pneg %p123
      $region26: #{basic_block.1} parent=11 // pred_check_branch
        %217 = sbr.rel (%p215) target = $region28
      $region27: #{basic_block.1} parent=11 // pred_region
        _
      $region28: #{basic_block.1} parent=11 // pred_fallthru
        _
      // Predicated region
      $region29: #{basic_block.1} parent=11 // pred_check
        %p218 = pneg %p144
      $region30: #{basic_block.1} parent=11 // pred_check_branch
        %220 = sbr.rel (%p218) target = $region32
      $region31: #{basic_block.1} parent=11 // pred_region
        _
      $region32: #{basic_block.1} parent=11 // pred_fallthru
        _
      // Predicated region
      $region33: #{basic_block.1} parent=11 // pred_check
        %p221 = pneg %p165
      $region34: #{basic_block.1} parent=11 // pred_check_branch
        %223 = sbr.rel (%p221) target = $region36
      $region35: #{basic_block.1} parent=11 // pred_region
        _
      $region36: #{basic_block.1} parent=11 // pred_fallthru
        _
    $region12: #{basic_block.1} parent=5 // pred_fallthru
      _
    %p224 = scmp.lt.s32.totalorder %s13, 2
    // Predicated region
    $region37: #{basic_block.1} parent=5 // pred_check
      %p225 = pneg %p224
    $region38: #{basic_block.1} parent=5 // pred_check_branch
      %227 = sbr.rel (%p225) target = $region40
    $region39: #{basic_block.1} parent=5 // pred_region
      // Predicated region
      $region41: #{basic_block.1} parent=39 // pred_check
        %p228 = pneg %p33
      $region42: #{basic_block.1} parent=39 // pred_check_branch
        %230 = sbr.rel (%p228) target = $region44
      $region43: #{basic_block.1} parent=39 // pred_region
        %s231 = smul.u32 4, %s13
        %p232 = scmp.lt.s32.totalorder %s231, 7
        %s233 = scalar_select %p232, %s231, 7
        %s234 = smul.addr %s233, 2
        %s235 = smul.addr %s234, 8
        %s236 = scalar_lea.vmem %s0, %s235
        %s237 = smul.u32 4, %s13
      $region44: #{basic_block.1} parent=39 // pred_fallthru
        _
    $region40: #{basic_block.1} parent=5 // pred_fallthru
      _
    %p238 = scmp.le.s32.totalorder 1, %s13
    %p239 = scmp.lt.s32.totalorder %s13, 3
    %p240 = pnand %p238, %p239
    %p241 = pneg %p240
    // Predicated region
    $region45: #{basic_block.1} parent=5 // pred_check
      _
    $region46: #{basic_block.1} parent=5 // pred_check_branch
      %243 = sbr.rel (%p240) target = $region48
    $region47: #{basic_block.1} parent=5 // pred_region
      %s244 = ssub.s32 %s13, 1
      %s245 = smul.u32 4, %s18
      %p246 = scmp.lt.s32.totalorder %s245, 7
      %s247 = scalar_select %p246, %s245, 7
      %s248 = smul.addr %s247, 2
      %s249 = smul.addr %s248, 8
      %s250 = scalar_lea.vmem %s0, %s249
      %p251 = pneg %p39
      %p252 = pneg %p36
      %p253 = pneg %p60
      %p254 = pneg %p57
      %p255 = pneg %p81
      %p256 = pneg %p78
      %p257 = pneg %p102
      %p258 = pneg %p99
      %p259 = pneg %p123
      %p260 = pneg %p120
      %p261 = pneg %p144
      %p262 = pneg %p141
      %p263 = pneg %p165
      %p264 = pneg %p162
      %p265 = pneg %p191
      %p266 = pneg %p188
      %s267 = smul.u32 4, %s18
      %p268 = scmp.lt.s32.totalorder %s267, 7
      %s269 = scalar_select %p268, %s267, 7
      %s270 = smul.addr %s269, 2
      %s271 = smul.addr %s270, 8
      %s272 = scalar_lea.vmem %s7, %s271
      %s273 = smul.u32 4, %s18
      %p274 = scmp.lt.s32.totalorder %s273, 7
      %s275 = scalar_select %p274, %s273, 7
      %s276 = smul.addr %s275, 2
      %s277 = smul.addr %s276, 8
      %s278 = scalar_lea.vmem %s0, %s277
      %s279 = smul.u32 4, %s18
      %s280 = smul.u32 4, %s18
      %p281 = scmp.lt.s32.totalorder %s280, 7
      %s282 = scalar_select %p281, %s280, 7
      %s283 = smul.addr %s282, 2
      %s284 = smul.addr %s283, 8
      %s285 = scalar_lea.vmem %s7, %s284
      %s286 = smul.u32 4, %s18
      %vm288 = vcmask 1040384
      %vm289 = vsmask.f32 256
      %vm290 = vmand %vm288, %vm289
      %v291 = vld [vmem:[#allocation2] sm:$0x1]
      %v292 = vsel %vm290, 0, %v291
      %293 = vst [vmem:[#allocation2] sm:$0x1] %v292
      %vm294 = vsmask.f32 7938
      %vm295 = vmand %vm288, %vm294
      %v296 = vld [vmem:[#allocation2 + $0x8] sm:$0x1]
      %v297 = vsel %vm295, 0, %v296
      %298 = vst [vmem:[#allocation2 + $0x8] sm:$0x1] %v297
      %v299 = vld [vmem:[%s278] sm:$0xff]
      %v300 = vld [vmem:[%s278 + $0x8] sm:$0xff]
      %v301 = vpack.c.bf16 %v299, %v299
      %v302 = vpack.c.bf16 %v300, %v300
      %vm303 = vsmask.f32 4368
      %vm304 = vmor %vm289, %vm303
      %v306 = vshrl.u32 %v301, 16
      %v308 = vrot.slane %v306, 7
      %v309 = vshll.u32 %v301, 16
      %v311 = vor.u32 %v308, %v309
      %v312 = vrot.slane %v308, 4
      %v314 = vshrl.u32 %v302, 16
      %v316 = vrot.slane %v314, 7
      %v317 = vshll.u32 %v302, 16
      %v319 = vor.u32 %v316, %v317
      %v320 = vsel %vm304, %v312, %v319
      %v321 = vrot.slane %v316, 4
      %vm325 = vcmask 1043456
      %vm326 = vmand %vm325, %vm294
      %v327 = vld [vmem:[#allocation2] sm:$0xf]
      %v328 = vsel %vm326, %v311, %v327
      %329 = vst [vmem:[#allocation2] sm:$0xf] %v328
      %330 = vst [vmem:[#allocation2 + $0x4] sm:$0xf] %v320
      %v331 = vld [vmem:[#allocation2 + $0x8] sm:$0x1]
      %v332 = vsel %vm290, %v321, %v331
      %333 = vst [vmem:[#allocation2 + $0x8] sm:$0x1] %v332
      %vm334 = vcmask 1041409
      %vm335 = vsmask.f32 1280
      %vm336 = vmand %vm334, %vm335
      %v337 = vld [vmem:[#allocation2 + $0x8] sm:$0x2]
      %v338 = vsel %vm336, 0, %v337
      %339 = vst [vmem:[#allocation2 + $0x8] sm:$0x2] %v338
      %vm340 = vsmask.f32 7942
      %vm341 = vmand %vm334, %vm340
      %v342 = vld [vmem:[#allocation2 + $0x10] sm:$0x2]
      %v343 = vsel %vm341, 0, %v342
      %344 = vst [vmem:[#allocation2 + $0x10] sm:$0x2] %v343
      %s345 = scalar_lea.vmem %s278, 16
      %v346 = vld [vmem:[%s345] sm:$0xff]
      %v347 = vld [vmem:[%s345 + $0x8] sm:$0xff]
      %v348 = vpack.c.bf16 %v346, %v346
      %v349 = vpack.c.bf16 %v347, %v347
      %vm350 = vsmask.f32 5392
      %vm351 = vmor %vm335, %vm350
      %v353 = vshrl.u32 %v348, 16
      %v355 = vrot.slane %v353, 6
      %v356 = vshll.u32 %v348, 16
      %v358 = vrot.slane %v356, 7
      %v359 = vor.u32 %v355, %v358
      %v360 = vrot.slane %v359, 4
      %v362 = vshrl.u32 %v349, 16
      %v364 = vrot.slane %v362, 6
      %v365 = vshll.u32 %v349, 16
      %v367 = vrot.slane %v365, 7
      %v368 = vor.u32 %v364, %v367
      %v369 = vsel %vm351, %v360, %v368
      %v370 = vrot.slane %v368, 4
      %vm374 = vcmask 1043457
      %vm375 = vmand %vm374, %vm340
      %v376 = vld [vmem:[#allocation2 + $0x8] sm:$0xe]
      %v377 = vsel %vm375, %v359, %v376
      %378 = vst [vmem:[#allocation2 + $0x8] sm:$0xe] %v377
      %379 = vst [vmem:[#allocation2 + $0xc] sm:$0xf] %v369
      %vm380 = vcmask 1041408
      %vm381 = vmand %vm380, %vm335
      %v382 = vld [vmem:[#allocation2 + $0x10] sm:$0x3]
      %v383 = vsel %vm381, %v370, %v382
      %384 = vst [vmem:[#allocation2 + $0x10] sm:$0x3] %v383
      %vm385 = vcmask 1042434
      %vm386 = vsmask.f32 2304
      %vm387 = vmand %vm385, %vm386
      %v388 = vld [vmem:[#allocation2 + $0x10] sm:$0x4]
      %v389 = vsel %vm387, 0, %v388
      %390 = vst [vmem:[#allocation2 + $0x10] sm:$0x4] %v389
      %vm391 = vsmask.f32 7946
      %vm392 = vmand %vm385, %vm391
      %v393 = vld [vmem:[#allocation2 + $0x18] sm:$0x4]
      %v394 = vsel %vm392, 0, %v393
      %395 = vst [vmem:[#allocation2 + $0x18] sm:$0x4] %v394
      %s396 = scalar_lea.vmem %s278, 32
      %v397 = vld [vmem:[%s396] sm:$0xff]
      %v398 = vld [vmem:[%s396 + $0x8] sm:$0xff]
      %v399 = vpack.c.bf16 %v397, %v397
      %v400 = vpack.c.bf16 %v398, %v398
      %vm401 = vsmask.f32 6416
      %vm402 = vmor %vm386, %vm401
      %v404 = vshrl.u32 %v399, 16
      %v406 = vrot.slane %v404, 5
      %v407 = vshll.u32 %v399, 16
      %v409 = vrot.slane %v407, 6
      %v410 = vor.u32 %v406, %v409
      %v411 = vrot.slane %v410, 4
      %v413 = vshrl.u32 %v400, 16
      %v415 = vrot.slane %v413, 5
      %v416 = vshll.u32 %v400, 16
      %v418 = vrot.slane %v416, 6
      %v419 = vor.u32 %v415, %v418
      %v420 = vsel %vm402, %v411, %v419
      %v421 = vrot.slane %v419, 4
      %vm425 = vcmask 1043458
      %vm426 = vmand %vm425, %vm391
      %v427 = vld [vmem:[#allocation2 + $0x10] sm:$0xc]
      %v428 = vsel %vm426, %v410, %v427
      %429 = vst [vmem:[#allocation2 + $0x10] sm:$0xc] %v428
      %430 = vst [vmem:[#allocation2 + $0x14] sm:$0xf] %v420
      %vm431 = vcmask 1042432
      %vm432 = vmand %vm431, %vm386
      %v433 = vld [vmem:[#allocation2 + $0x18] sm:$0x7]
      %v434 = vsel %vm432, %v421, %v433
      %435 = vst [vmem:[#allocation2 + $0x18] sm:$0x7] %v434
      %vm436 = vcmask 1043459
      %vm437 = vsmask.f32 3328
      %vm438 = vmand %vm436, %vm437
      %v439 = vld [vmem:[#allocation2 + $0x18] sm:$0x8]
      %v440 = vsel %vm438, 0, %v439
      %441 = vst [vmem:[#allocation2 + $0x18] sm:$0x8] %v440
      %vm442 = vsmask.f32 7950
      %vm443 = vmand %vm436, %vm442
      %v444 = vld [vmem:[#allocation2 + $0x20] sm:$0x8]
      %v445 = vsel %vm443, 0, %v444
      %446 = vst [vmem:[#allocation2 + $0x20] sm:$0x8] %v445
      %s447 = scalar_lea.vmem %s278, 48
      %v448 = vld [vmem:[%s447] sm:$0xff]
      %v449 = vld [vmem:[%s447 + $0x8] sm:$0xff]
      %v450 = vpack.c.bf16 %v448, %v448
      %v451 = vpack.c.bf16 %v449, %v449
      %vm452 = vsmask.f32 7440
      %vm453 = vmor %vm437, %vm452
      %v455 = vshll.u32 %v450, 16
      %v457 = vrot.slane %v455, 5
      %v458 = vshrl.u32 %v450, 16
      %v460 = vrot.slane %v458, 4
      %v461 = vor.u32 %v460, %v457
      %v462 = vrot.slane %v461, 4
      %v464 = vshll.u32 %v451, 16
      %v466 = vrot.slane %v464, 5
      %v467 = vsel %vm453, %v462, %v466
      %v468 = vshrl.u32 %v451, 16
      %v470 = vrot.slane %v468, 4
      %v471 = vor.u32 %v470, %v466
      %v472 = vrot.slane %v471, 4
      %v476 = vld [vmem:[#allocation2 + $0x18] sm:$0x8]
      %v477 = vsel %vm443, %v457, %v476
      %478 = vst [vmem:[#allocation2 + $0x18] sm:$0x8] %v477
      %479 = vst [vmem:[#allocation2 + $0x1c] sm:$0xf] %v467
      %vm480 = vmand %vm325, %vm437
      %v481 = vld [vmem:[#allocation2 + $0x20] sm:$0xf]
      %v482 = vsel %vm480, %v472, %v481
      %483 = vst [vmem:[#allocation2 + $0x20] sm:$0xf] %v482
      %v484 = vld [vmem:[#allocation2] sm:$0xf]
      %v485 = vld [vmem:[#allocation2 + $0x4] sm:$0xf]
      %v486 = vld [vmem:[#allocation2 + $0x8] sm:$0xf]
      %v487 = vld [vmem:[#allocation2 + $0xc] sm:$0xf]
      %v488 = vld [vmem:[#allocation2 + $0x10] sm:$0xf]
      %v489 = vld [vmem:[#allocation2 + $0x14] sm:$0xf]
      %v490 = vld [vmem:[#allocation2 + $0x18] sm:$0xf]
      %v491 = vld [vmem:[#allocation2 + $0x1c] sm:$0xf]
      %v492 = vld [vmem:[#allocation2 + $0x20] sm:$0x7]
      %v493 = vld [vmem:[%s1] sm:$0xf]
      %v494 = vld [vmem:[%s1 + $0x4] sm:$0xf]
      %v495 = vld [vmem:[%s1 + $0x8] sm:$0xf]
      %v496 = vld [vmem:[%s1 + $0xc] sm:$0xf]
      %v497 = vld [vmem:[%s1 + $0x10] sm:$0xf]
      %v498 = vld [vmem:[%s1 + $0x14] sm:$0xf]
      %v499 = vld [vmem:[%s1 + $0x18] sm:$0xf]
      %v500 = vld [vmem:[%s1 + $0x1c] sm:$0xf]
      %v501 = vld [vmem:[%s1 + $0x20] sm:$0xf]
      %v502 = vld [vmem:[%s1 + $0x24] sm:$0xf]
      %v503 = vld [vmem:[%s1 + $0x28] sm:$0xf]
      %v504 = vld [vmem:[%s1 + $0x2c] sm:$0xf]
      %v505 = vld [vmem:[%s1 + $0x30] sm:$0xf]
      %v506 = vld [vmem:[%s1 + $0x34] sm:$0xf]
      %v507 = vld [vmem:[%s1 + $0x38] sm:$0xf]
      %v508 = vld [vmem:[%s1 + $0x3c] sm:$0xf]
      %v509 = vld [vmem:[#allocation2 + $0x20] sm:$0xf]
      %s510 = scalar_lea.vmem %s1, 64
      %v511 = vld [vmem:[%s510] sm:$0xf]
      %v512 = vld [vmem:[%s510 + $0x4] sm:$0xf]
      %v513 = vld [vmem:[%s510 + $0x8] sm:$0xf]
      %v514 = vld [vmem:[%s510 + $0xc] sm:$0xf]
      %v515 = vld [vmem:[%s510 + $0x10] sm:$0xf]
      %v516 = vld [vmem:[%s510 + $0x14] sm:$0xf]
      %v517 = vld [vmem:[%s510 + $0x18] sm:$0xf]
      %v518 = vld [vmem:[%s510 + $0x1c] sm:$0xf]
      %v519 = vld [vmem:[%s510 + $0x20] sm:$0xf]
      %v520 = vld [vmem:[%s510 + $0x24] sm:$0xf]
      %v521 = vld [vmem:[%s510 + $0x28] sm:$0xf]
      %v522 = vld [vmem:[%s510 + $0x2c] sm:$0xf]
      %v523 = vld [vmem:[%s510 + $0x30] sm:$0xf]
      %v524 = vld [vmem:[%s510 + $0x34] sm:$0xf]
      %v525 = vld [vmem:[%s510 + $0x38] sm:$0xf]
      %v526 = vld [vmem:[%s510 + $0x3c] sm:$0xf]
      %v536 = vunpack.c.l.b16 %v484
      %v537 = vunpack.c.l.b16 %v485
      %v538 = vunpack.c.l.b16 %v486
      %v539 = vunpack.c.l.b16 %v487
      %v540 = vunpack.c.l.b16 %v488
      %v541 = vunpack.c.l.b16 %v489
      %v542 = vunpack.c.l.b16 %v490
      %v543 = vunpack.c.l.b16 %v491
      %v544 = vunpack.c.l.b16 %v509
      %v545 = vpack.c.b16 %v537, %v536
      %v546 = vpack.c.b16 %v539, %v538
      %v547 = vpack.c.b16 %v541, %v540
      %v548 = vpack.c.b16 %v543, %v542
      %v549 = vpack.c.b16 %v544, %v544
      %vm550 = vsmask.f32 7424
      %v552 = vshrl.u32 %v545, 16
      %v554 = vshll.u32 %v545, 16
      %v556 = vrot.slane %v554, 1
      %v557 = vor.u32 %v552, %v556
      %v559 = vshll.u32 %v546, 16
      %v561 = vrot.slane %v559, 1
      %v562 = vsel %vm550, %v557, %v561
      %v563 = vshrl.u32 %v546, 16
      %v565 = vor.u32 %v563, %v561
      %v567 = vshll.u32 %v547, 16
      %v569 = vrot.slane %v567, 1
      %v570 = vsel %vm550, %v565, %v569
      %v571 = vshrl.u32 %v547, 16
      %v573 = vor.u32 %v571, %v569
      %v575 = vshll.u32 %v548, 16
      %v577 = vrot.slane %v575, 1
      %v578 = vsel %vm550, %v573, %v577
      %v579 = vshrl.u32 %v548, 16
      %v581 = vor.u32 %v579, %v577
      %v583 = vshll.u32 %v549, 16
      %v585 = vrot.slane %v583, 1
      %v586 = vsel %vm550, %v581, %v585
      %v587 = vshrl.u32 %v549, 16
      %v589 = vor.u32 %v587, %v585
      %v611 = vunpack.c.l.b16 %v511
      %v612 = vunpack.c.l.b16 %v512
      %v613 = vunpack.c.l.b16 %v513
      %v614 = vunpack.c.l.b16 %v514
      %v615 = vunpack.c.l.b16 %v515
      %v616 = vunpack.c.l.b16 %v516
      %v617 = vunpack.c.l.b16 %v517
      %v618 = vunpack.c.l.b16 %v518
      %v619 = vunpack.c.l.b16 %v519
      %v620 = vunpack.c.l.b16 %v520
      %v621 = vunpack.c.l.b16 %v521
      %v622 = vunpack.c.l.b16 %v522
      %v623 = vunpack.c.l.b16 %v523
      %v624 = vunpack.c.l.b16 %v524
      %v625 = vunpack.c.l.b16 %v525
      %v626 = vunpack.c.l.b16 %v526
      %v627 = vpack.c.b16 %v612, %v611
      %v628 = vpack.c.b16 %v614, %v613
      %v629 = vpack.c.b16 %v616, %v615
      %v630 = vpack.c.b16 %v618, %v617
      %v631 = vpack.c.b16 %v620, %v619
      %v632 = vpack.c.b16 %v622, %v621
      %v633 = vpack.c.b16 %v624, %v623
      %v634 = vpack.c.b16 %v626, %v625
      %643 = vmatpush.bf16.msra.mxu0 %v634
      %644 = vmatpush.bf16.msra.mxu0 %v633
      %645 = vmatpush.bf16.msra.mxu0 %v632
      %646 = vmatpush.bf16.msra.mxu0 %v631
      %647 = vmatpush.bf16.msra.mxu0 %v630
      %648 = vmatpush.bf16.msra.mxu0 %v629
      %649 = vmatpush.bf16.msra.mxu0 %v628
      %650 = vmatpush.bf16.msra.mxu0 %v627
      %651 = vmatmul.bf16.gmra.mxu0 %v562
      %v652 = vpop.f32.mrf.mxu0
      %v653 = vadd.f32 0.0, %v652
      %v654 = vpop.f32.mrf.mxu0
      %v655 = vadd.f32 0.0, %v654
      %656 = vmatmul.bf16.gmra.mxu0 %v570
      %v657 = vpop.f32.mrf.mxu0
      %v658 = vadd.f32 0.0, %v657
      %v659 = vpop.f32.mrf.mxu0
      %v660 = vadd.f32 0.0, %v659
      %661 = vmatmul.bf16.gmra.mxu0 %v578
      %v662 = vpop.f32.mrf.mxu0
      %v663 = vadd.f32 0.0, %v662
      %v664 = vpop.f32.mrf.mxu0
      %v665 = vadd.f32 0.0, %v664
      %666 = vmatmul.bf16.gmra.mxu0 %v586
      %v667 = vpop.f32.mrf.mxu0
      %v668 = vadd.f32 0.0, %v667
      %v669 = vpop.f32.mrf.mxu0
      %v670 = vadd.f32 0.0, %v669
      %671 = vmatmul.bf16.gmra.mxu0 %v589
      %v672 = vpop.f32.mrf.mxu0
      %v673 = vadd.f32 0.0, %v672
      %v674 = vpop.f32.mrf.mxu0
      %675 = vdwg.mxu0
      %v677 = vunpack.c.l.b16 %v492
      %v678 = vpack.c.b16 %v677, %v677
      %v700 = vunpack.c.l.b16 %v493
      %v701 = vunpack.c.l.b16 %v494
      %v702 = vunpack.c.l.b16 %v495
      %v703 = vunpack.c.l.b16 %v496
      %v704 = vunpack.c.l.b16 %v497
      %v705 = vunpack.c.l.b16 %v498
      %v706 = vunpack.c.l.b16 %v499
      %v707 = vunpack.c.l.b16 %v500
      %v708 = vunpack.c.l.b16 %v501
      %v709 = vunpack.c.l.b16 %v502
      %v710 = vunpack.c.l.b16 %v503
      %v711 = vunpack.c.l.b16 %v504
      %v712 = vunpack.c.l.b16 %v505
      %v713 = vunpack.c.l.b16 %v506
      %v714 = vunpack.c.l.b16 %v507
      %v715 = vunpack.c.l.b16 %v508
      %v716 = vpack.c.b16 %v701, %v700
      %v717 = vpack.c.b16 %v703, %v702
      %v718 = vpack.c.b16 %v705, %v704
      %v719 = vpack.c.b16 %v707, %v706
      %v720 = vpack.c.b16 %v709, %v708
      %v721 = vpack.c.b16 %v711, %v710
      %v722 = vpack.c.b16 %v713, %v712
      %v723 = vpack.c.b16 %v715, %v714
      %732 = vmatpush.bf16.msra.mxu0 %v723
      %733 = vmatpush.bf16.msra.mxu0 %v722
      %734 = vmatpush.bf16.msra.mxu0 %v721
      %735 = vmatpush.bf16.msra.mxu0 %v720
      %736 = vmatpush.bf16.msra.mxu0 %v719
      %737 = vmatpush.bf16.msra.mxu0 %v718
      %738 = vmatpush.bf16.msra.mxu0 %v717
      %739 = vmatpush.bf16.msra.mxu0 %v716
      %740 = vmatmul.bf16.gmra.mxu0 %v545
      %v741 = vpop.f32.mrf.mxu0
      %v742 = vadd.f32 %v653, %v741
      %v743 = vpop.f32.mrf.mxu0
      %v744 = vadd.f32 %v655, %v743
      %745 = vmatmul.bf16.gmra.mxu0 %v546
      %v746 = vpop.f32.mrf.mxu0
      %v747 = vadd.f32 %v658, %v746
      %v748 = vpop.f32.mrf.mxu0
      %v749 = vadd.f32 %v660, %v748
      %750 = vmatmul.bf16.gmra.mxu0 %v547
      %v751 = vpop.f32.mrf.mxu0
      %v752 = vadd.f32 %v663, %v751
      %v753 = vpop.f32.mrf.mxu0
      %v754 = vadd.f32 %v665, %v753
      %755 = vmatmul.bf16.gmra.mxu0 %v548
      %v756 = vpop.f32.mrf.mxu0
      %v757 = vadd.f32 %v668, %v756
      %v758 = vpop.f32.mrf.mxu0
      %v759 = vadd.f32 %v670, %v758
      %760 = vmatmul.bf16.gmra.mxu0 %v678
      %v761 = vpop.f32.mrf.mxu0
      %v762 = vadd.f32 %v673, %v761
      %v763 = vpop.f32.mrf.mxu0
      %764 = vdwg.mxu0
      %v765 = vld [vmem:[#allocation2] sm:$0xe]
      %s766 = scalar_lea.vmem %s1, 128
      %v767 = vld [vmem:[%s766] sm:$0xf]
      %v768 = vld [vmem:[%s766 + $0x4] sm:$0xf]
      %v769 = vld [vmem:[%s766 + $0x8] sm:$0xf]
      %v770 = vld [vmem:[%s766 + $0xc] sm:$0xf]
      %v771 = vld [vmem:[%s766 + $0x10] sm:$0xf]
      %v772 = vld [vmem:[%s766 + $0x14] sm:$0xf]
      %v773 = vld [vmem:[%s766 + $0x18] sm:$0xf]
      %v774 = vld [vmem:[%s766 + $0x1c] sm:$0xf]
      %v775 = vld [vmem:[%s766 + $0x20] sm:$0xf]
      %v776 = vld [vmem:[%s766 + $0x24] sm:$0xf]
      %v777 = vld [vmem:[%s766 + $0x28] sm:$0xf]
      %v778 = vld [vmem:[%s766 + $0x2c] sm:$0xf]
      %v779 = vld [vmem:[%s766 + $0x30] sm:$0xf]
      %v780 = vld [vmem:[%s766 + $0x34] sm:$0xf]
      %v781 = vld [vmem:[%s766 + $0x38] sm:$0xf]
      %v782 = vld [vmem:[%s766 + $0x3c] sm:$0xf]
      %v784 = vunpack.c.l.b16 %v765
      %v785 = vpack.c.b16 %v537, %v784
      %vm786 = vcmask 1046528
      %v787 = vrot.slane %v785, 1
      %v788 = vrot.slane %v546, 1
      %v789 = vsel %vm786, %v787, %v788
      %v790 = vrot.slane %v547, 1
      %v791 = vsel %vm786, %v788, %v790
      %v792 = vrot.slane %v548, 1
      %v793 = vsel %vm786, %v790, %v792
      %v794 = vrot.slane %v549, 1
      %v795 = vsel %vm786, %v792, %v794
      %v817 = vunpack.c.l.b16 %v767
      %v818 = vunpack.c.l.b16 %v768
      %v819 = vunpack.c.l.b16 %v769
      %v820 = vunpack.c.l.b16 %v770
      %v821 = vunpack.c.l.b16 %v771
      %v822 = vunpack.c.l.b16 %v772
      %v823 = vunpack.c.l.b16 %v773
      %v824 = vunpack.c.l.b16 %v774
      %v825 = vunpack.c.l.b16 %v775
      %v826 = vunpack.c.l.b16 %v776
      %v827 = vunpack.c.l.b16 %v777
      %v828 = vunpack.c.l.b16 %v778
      %v829 = vunpack.c.l.b16 %v779
      %v830 = vunpack.c.l.b16 %v780
      %v831 = vunpack.c.l.b16 %v781
      %v832 = vunpack.c.l.b16 %v782
      %v833 = vpack.c.b16 %v818, %v817
      %v834 = vpack.c.b16 %v820, %v819
      %v835 = vpack.c.b16 %v822, %v821
      %v836 = vpack.c.b16 %v824, %v823
      %v837 = vpack.c.b16 %v826, %v825
      %v838 = vpack.c.b16 %v828, %v827
      %v839 = vpack.c.b16 %v830, %v829
      %v840 = vpack.c.b16 %v832, %v831
      %849 = vmatpush.bf16.msra.mxu0 %v840
      %850 = vmatpush.bf16.msra.mxu0 %v839
      %851 = vmatpush.bf16.msra.mxu0 %v838
      %852 = vmatpush.bf16.msra.mxu0 %v837
      %853 = vmatpush.bf16.msra.mxu0 %v836
      %854 = vmatpush.bf16.msra.mxu0 %v835
      %855 = vmatpush.bf16.msra.mxu0 %v834
      %856 = vmatpush.bf16.msra.mxu0 %v833
      %857 = vmatmul.bf16.gmra.mxu0 %v789
      %v858 = vpop.f32.mrf.mxu0
      %v859 = vadd.f32 0.0, %v858
      %v860 = vpop.f32.mrf.mxu0
      %v861 = vadd.f32 0.0, %v860
      %862 = vmatmul.bf16.gmra.mxu0 %v791
      %v863 = vpop.f32.mrf.mxu0
      %v864 = vadd.f32 0.0, %v863
      %v865 = vpop.f32.mrf.mxu0
      %v866 = vadd.f32 0.0, %v865
      %867 = vmatmul.bf16.gmra.mxu0 %v793
      %v868 = vpop.f32.mrf.mxu0
      %v869 = vadd.f32 0.0, %v868
      %v870 = vpop.f32.mrf.mxu0
      %v871 = vadd.f32 0.0, %v870
      %872 = vmatmul.bf16.gmra.mxu0 %v795
      %v873 = vpop.f32.mrf.mxu0
      %v874 = vadd.f32 0.0, %v873
      %v875 = vpop.f32.mrf.mxu0
      %v876 = vadd.f32 0.0, %v875
      %877 = vmatmul.bf16.gmra.mxu0 %v794
      %v878 = vpop.f32.mrf.mxu0
      %v879 = vadd.f32 0.0, %v878
      %v880 = vpop.f32.mrf.mxu0
      %881 = vdwg.mxu0
      %v882 = vadd.f32 %v742, %v859
      %v883 = vadd.f32 %v744, %v861
      %v884 = vadd.f32 %v747, %v864
      %v885 = vadd.f32 %v749, %v866
      %v886 = vadd.f32 %v752, %v869
      %v887 = vadd.f32 %v754, %v871
      %v888 = vadd.f32 %v757, %v874
      %v889 = vadd.f32 %v759, %v876
      %v890 = vadd.f32 %v762, %v879
      %v891 = vld [vmem:[%s2] sm:$0x1]
      %v893 = vperm.slane %v891, 0
      %v895 = vmul.f32 %v882, %v893
      %v896 = vmul.f32 %v883, %v893
      %v897 = vmul.f32 %v884, %v893
      %v898 = vmul.f32 %v885, %v893
      %v899 = vmul.f32 %v886, %v893
      %v900 = vmul.f32 %v887, %v893
      %v901 = vmul.f32 %v888, %v893
      %v902 = vmul.f32 %v889, %v893
      %v903 = vmul.f32 %v890, %v893
      %v904 = vld [vmem:[%s3] sm:$0x1]
      %v906 = vperm.slane %v904, 0
      %v908 = vadd.f32 %v895, %v906
      %v909 = vadd.f32 %v896, %v906
      %v910 = vadd.f32 %v897, %v906
      %v911 = vadd.f32 %v898, %v906
      %v912 = vadd.f32 %v899, %v906
      %v913 = vadd.f32 %v900, %v906
      %v914 = vadd.f32 %v901, %v906
      %v915 = vadd.f32 %v902, %v906
      %v916 = vadd.f32 %v903, %v906
      %v917 = vmax.f32 %v908, 0.0
      %v918 = vmax.f32 %v909, 0.0
      %v919 = vmax.f32 %v910, 0.0
      %v920 = vmax.f32 %v911, 0.0
      %v921 = vmax.f32 %v912, 0.0
      %v922 = vmax.f32 %v913, 0.0
      %v923 = vmax.f32 %v914, 0.0
      %v924 = vmax.f32 %v915, 0.0
      %v925 = vmax.f32 %v916, 0.0
      %v926 = vpack.c.bf16 %v917, %v917
      %v927 = vpack.c.bf16 %v918, %v918
      %v928 = vpack.c.bf16 %v919, %v919
      %v929 = vpack.c.bf16 %v920, %v920
      %v930 = vpack.c.bf16 %v921, %v921
      %v931 = vpack.c.bf16 %v922, %v922
      %v932 = vpack.c.bf16 %v923, %v923
      %v933 = vpack.c.bf16 %v924, %v924
      %v934 = vpack.c.bf16 %v925, %v925
      %v936 = vshrl.u32 %v926, 16
      %v938 = vrot.slane %v936, 7
      %v939 = vshll.u32 %v926, 16
      %v941 = vor.u32 %v938, %v939
      %v942 = vrot.slane %v938, 4
      %v944 = vshrl.u32 %v927, 16
      %v946 = vrot.slane %v944, 7
      %v947 = vshll.u32 %v927, 16
      %v949 = vor.u32 %v946, %v947
      %v950 = vsel %vm304, %v942, %v949
      %v951 = vrot.slane %v946, 4
      %v953 = vshrl.u32 %v928, 16
      %v955 = vrot.slane %v953, 7
      %v956 = vshll.u32 %v928, 16
      %v958 = vor.u32 %v955, %v956
      %v959 = vsel %vm304, %v951, %v958
      %v960 = vrot.slane %v955, 4
      %v962 = vshrl.u32 %v929, 16
      %v964 = vrot.slane %v962, 7
      %v965 = vshll.u32 %v929, 16
      %v967 = vor.u32 %v964, %v965
      %v968 = vsel %vm304, %v960, %v967
      %v969 = vrot.slane %v964, 4
      %v971 = vshrl.u32 %v930, 16
      %v973 = vrot.slane %v971, 7
      %v974 = vshll.u32 %v930, 16
      %v976 = vor.u32 %v973, %v974
      %v977 = vsel %vm304, %v969, %v976
      %v978 = vrot.slane %v973, 4
      %v980 = vshrl.u32 %v931, 16
      %v982 = vrot.slane %v980, 7
      %v983 = vshll.u32 %v931, 16
      %v985 = vor.u32 %v982, %v983
      %v986 = vsel %vm304, %v978, %v985
      %v987 = vrot.slane %v982, 4
      %v989 = vshrl.u32 %v932, 16
      %v991 = vrot.slane %v989, 7
      %v992 = vshll.u32 %v932, 16
      %v994 = vor.u32 %v991, %v992
      %v995 = vsel %vm304, %v987, %v994
      %v996 = vrot.slane %v991, 4
      %v998 = vshrl.u32 %v933, 16
      %v1000 = vrot.slane %v998, 7
      %v1001 = vshll.u32 %v933, 16
      %v1003 = vor.u32 %v1000, %v1001
      %v1004 = vsel %vm304, %v996, %v1003
      %v1005 = vrot.slane %v1000, 4
      %v1007 = vshrl.u32 %v934, 16
      %v1009 = vrot.slane %v1007, 7
      %v1010 = vshll.u32 %v934, 16
      %v1012 = vor.u32 %v1009, %v1010
      %v1013 = vsel %vm304, %v1005, %v1012
      %v1023 = vld [vmem:[#allocation3] sm:$0xf]
      %v1024 = vsel %vm326, %v941, %v1023
      %1025 = vst [vmem:[#allocation3] sm:$0xf] %v1024
      %1026 = vst [vmem:[#allocation3 + $0x4] sm:$0xf] %v950
      %1027 = vst [vmem:[#allocation3 + $0x8] sm:$0xf] %v959
      %1028 = vst [vmem:[#allocation3 + $0xc] sm:$0xf] %v968
      %1029 = vst [vmem:[#allocation3 + $0x10] sm:$0xf] %v977
      %1030 = vst [vmem:[#allocation3 + $0x14] sm:$0xf] %v986
      %1031 = vst [vmem:[#allocation3 + $0x18] sm:$0xf] %v995
      %1032 = vst [vmem:[#allocation3 + $0x1c] sm:$0xf] %v1004
      %v1033 = vld [vmem:[#allocation3 + $0x20] sm:$0xf]
      %v1034 = vsel %vm480, %v1013, %v1033
      %1035 = vst [vmem:[#allocation3 + $0x20] sm:$0xf] %v1034
      %v1036 = vld [vmem:[#allocation3] sm:$0x1]
      %v1037 = vsel %vm290, 0, %v1036
      %1038 = vst [vmem:[#allocation3] sm:$0x1] %v1037
      %v1039 = vld [vmem:[#allocation3 + $0x8] sm:$0x1]
      %v1040 = vsel %vm295, 0, %v1039
      %1041 = vst [vmem:[#allocation3 + $0x8] sm:$0x1] %v1040
      %v1042 = vld [vmem:[#allocation3 + $0x8] sm:$0x2]
      %v1043 = vsel %vm336, 0, %v1042
      %1044 = vst [vmem:[#allocation3 + $0x8] sm:$0x2] %v1043
      %v1045 = vld [vmem:[#allocation3 + $0x10] sm:$0x2]
      %v1046 = vsel %vm341, 0, %v1045
      %1047 = vst [vmem:[#allocation3 + $0x10] sm:$0x2] %v1046
      %v1048 = vld [vmem:[#allocation3 + $0x10] sm:$0x4]
      %v1049 = vsel %vm387, 0, %v1048
      %1050 = vst [vmem:[#allocation3 + $0x10] sm:$0x4] %v1049
      %v1051 = vld [vmem:[#allocation3 + $0x18] sm:$0x4]
      %v1052 = vsel %vm392, 0, %v1051
      %1053 = vst [vmem:[#allocation3 + $0x18] sm:$0x4] %v1052
      %v1054 = vld [vmem:[#allocation3 + $0x18] sm:$0x8]
      %v1055 = vsel %vm438, 0, %v1054
      %1056 = vst [vmem:[#allocation3 + $0x18] sm:$0x8] %v1055
      %v1057 = vld [vmem:[#allocation3 + $0x20] sm:$0x8]
      %v1058 = vsel %vm443, 0, %v1057
      %1059 = vst [vmem:[#allocation3 + $0x20] sm:$0x8] %v1058
      %v1060 = vld [vmem:[#allocation3] sm:$0xf]
      %v1061 = vld [vmem:[#allocation3 + $0x4] sm:$0xf]
      %v1062 = vld [vmem:[#allocation3 + $0x8] sm:$0xf]
      %v1063 = vld [vmem:[#allocation3 + $0xc] sm:$0xf]
      %v1064 = vld [vmem:[#allocation3 + $0x10] sm:$0xf]
      %v1065 = vld [vmem:[#allocation3 + $0x14] sm:$0xf]
      %v1066 = vld [vmem:[#allocation3 + $0x18] sm:$0xf]
      %v1067 = vld [vmem:[#allocation3 + $0x1c] sm:$0xf]
      %v1068 = vld [vmem:[#allocation3 + $0x20] sm:$0x7]
      %v1069 = vld [vmem:[%s4] sm:$0xf]
      %v1070 = vld [vmem:[%s4 + $0x4] sm:$0xf]
      %v1071 = vld [vmem:[%s4 + $0x8] sm:$0xf]
      %v1072 = vld [vmem:[%s4 + $0xc] sm:$0xf]
      %v1073 = vld [vmem:[%s4 + $0x10] sm:$0xf]
      %v1074 = vld [vmem:[%s4 + $0x14] sm:$0xf]
      %v1075 = vld [vmem:[%s4 + $0x18] sm:$0xf]
      %v1076 = vld [vmem:[%s4 + $0x1c] sm:$0xf]
      %v1077 = vld [vmem:[%s4 + $0x20] sm:$0xf]
      %v1078 = vld [vmem:[%s4 + $0x24] sm:$0xf]
      %v1079 = vld [vmem:[%s4 + $0x28] sm:$0xf]
      %v1080 = vld [vmem:[%s4 + $0x2c] sm:$0xf]
      %v1081 = vld [vmem:[%s4 + $0x30] sm:$0xf]
      %v1082 = vld [vmem:[%s4 + $0x34] sm:$0xf]
      %v1083 = vld [vmem:[%s4 + $0x38] sm:$0xf]
      %v1084 = vld [vmem:[%s4 + $0x3c] sm:$0xf]
      %v1085 = vld [vmem:[#allocation3 + $0x20] sm:$0xf]
      %s1086 = scalar_lea.vmem %s4, 64
      %v1087 = vld [vmem:[%s1086] sm:$0xf]
      %v1088 = vld [vmem:[%s1086 + $0x4] sm:$0xf]
      %v1089 = vld [vmem:[%s1086 + $0x8] sm:$0xf]
      %v1090 = vld [vmem:[%s1086 + $0xc] sm:$0xf]
      %v1091 = vld [vmem:[%s1086 + $0x10] sm:$0xf]
      %v1092 = vld [vmem:[%s1086 + $0x14] sm:$0xf]
      %v1093 = vld [vmem:[%s1086 + $0x18] sm:$0xf]
      %v1094 = vld [vmem:[%s1086 + $0x1c] sm:$0xf]
      %v1095 = vld [vmem:[%s1086 + $0x20] sm:$0xf]
      %v1096 = vld [vmem:[%s1086 + $0x24] sm:$0xf]
      %v1097 = vld [vmem:[%s1086 + $0x28] sm:$0xf]
      %v1098 = vld [vmem:[%s1086 + $0x2c] sm:$0xf]
      %v1099 = vld [vmem:[%s1086 + $0x30] sm:$0xf]
      %v1100 = vld [vmem:[%s1086 + $0x34] sm:$0xf]
      %v1101 = vld [vmem:[%s1086 + $0x38] sm:$0xf]
      %v1102 = vld [vmem:[%s1086 + $0x3c] sm:$0xf]
      %v1112 = vunpack.c.l.b16 %v1060
      %v1113 = vunpack.c.l.b16 %v1061
      %v1114 = vunpack.c.l.b16 %v1062
      %v1115 = vunpack.c.l.b16 %v1063
      %v1116 = vunpack.c.l.b16 %v1064
      %v1117 = vunpack.c.l.b16 %v1065
      %v1118 = vunpack.c.l.b16 %v1066
      %v1119 = vunpack.c.l.b16 %v1067
      %v1120 = vunpack.c.l.b16 %v1085
      %v1121 = vpack.c.b16 %v1113, %v1112
      %v1122 = vpack.c.b16 %v1115, %v1114
      %v1123 = vpack.c.b16 %v1117, %v1116
      %v1124 = vpack.c.b16 %v1119, %v1118
      %v1125 = vpack.c.b16 %v1120, %v1120
      %v1127 = vshrl.u32 %v1121, 16
      %v1129 = vshll.u32 %v1121, 16
      %v1131 = vrot.slane %v1129, 1
      %v1132 = vor.u32 %v1127, %v1131
      %v1134 = vshll.u32 %v1122, 16
      %v1136 = vrot.slane %v1134, 1
      %v1137 = vsel %vm550, %v1132, %v1136
      %v1138 = vshrl.u32 %v1122, 16
      %v1140 = vor.u32 %v1138, %v1136
      %v1142 = vshll.u32 %v1123, 16
      %v1144 = vrot.slane %v1142, 1
      %v1145 = vsel %vm550, %v1140, %v1144
      %v1146 = vshrl.u32 %v1123, 16
      %v1148 = vor.u32 %v1146, %v1144
      %v1150 = vshll.u32 %v1124, 16
      %v1152 = vrot.slane %v1150, 1
      %v1153 = vsel %vm550, %v1148, %v1152
      %v1154 = vshrl.u32 %v1124, 16
      %v1156 = vor.u32 %v1154, %v1152
      %v1158 = vshll.u32 %v1125, 16
      %v1160 = vrot.slane %v1158, 1
      %v1161 = vsel %vm550, %v1156, %v1160
      %v1162 = vshrl.u32 %v1125, 16
      %v1164 = vor.u32 %v1162, %v1160
      %v1186 = vunpack.c.l.b16 %v1087
      %v1187 = vunpack.c.l.b16 %v1088
      %v1188 = vunpack.c.l.b16 %v1089
      %v1189 = vunpack.c.l.b16 %v1090
      %v1190 = vunpack.c.l.b16 %v1091
      %v1191 = vunpack.c.l.b16 %v1092
      %v1192 = vunpack.c.l.b16 %v1093
      %v1193 = vunpack.c.l.b16 %v1094
      %v1194 = vunpack.c.l.b16 %v1095
      %v1195 = vunpack.c.l.b16 %v1096
      %v1196 = vunpack.c.l.b16 %v1097
      %v1197 = vunpack.c.l.b16 %v1098
      %v1198 = vunpack.c.l.b16 %v1099
      %v1199 = vunpack.c.l.b16 %v1100
      %v1200 = vunpack.c.l.b16 %v1101
      %v1201 = vunpack.c.l.b16 %v1102
      %v1202 = vpack.c.b16 %v1187, %v1186
      %v1203 = vpack.c.b16 %v1189, %v1188
      %v1204 = vpack.c.b16 %v1191, %v1190
      %v1205 = vpack.c.b16 %v1193, %v1192
      %v1206 = vpack.c.b16 %v1195, %v1194
      %v1207 = vpack.c.b16 %v1197, %v1196
      %v1208 = vpack.c.b16 %v1199, %v1198
      %v1209 = vpack.c.b16 %v1201, %v1200
      %1218 = vmatpush.bf16.msra.mxu0 %v1209
      %1219 = vmatpush.bf16.msra.mxu0 %v1208
      %1220 = vmatpush.bf16.msra.mxu0 %v1207
      %1221 = vmatpush.bf16.msra.mxu0 %v1206
      %1222 = vmatpush.bf16.msra.mxu0 %v1205
      %1223 = vmatpush.bf16.msra.mxu0 %v1204
      %1224 = vmatpush.bf16.msra.mxu0 %v1203
      %1225 = vmatpush.bf16.msra.mxu0 %v1202
      %1226 = vmatmul.bf16.gmra.mxu0 %v1137
      %v1227 = vpop.f32.mrf.mxu0
      %v1228 = vadd.f32 0.0, %v1227
      %v1229 = vpop.f32.mrf.mxu0
      %v1230 = vadd.f32 0.0, %v1229
      %1231 = vmatmul.bf16.gmra.mxu0 %v1145
      %v1232 = vpop.f32.mrf.mxu0
      %v1233 = vadd.f32 0.0, %v1232
      %v1234 = vpop.f32.mrf.mxu0
      %v1235 = vadd.f32 0.0, %v1234
      %1236 = vmatmul.bf16.gmra.mxu0 %v1153
      %v1237 = vpop.f32.mrf.mxu0
      %v1238 = vadd.f32 0.0, %v1237
      %v1239 = vpop.f32.mrf.mxu0
      %v1240 = vadd.f32 0.0, %v1239
      %1241 = vmatmul.bf16.gmra.mxu0 %v1161
      %v1242 = vpop.f32.mrf.mxu0
      %v1243 = vadd.f32 0.0, %v1242
      %v1244 = vpop.f32.mrf.mxu0
      %v1245 = vadd.f32 0.0, %v1244
      %1246 = vmatmul.bf16.gmra.mxu0 %v1164
      %v1247 = vpop.f32.mrf.mxu0
      %v1248 = vadd.f32 0.0, %v1247
      %v1249 = vpop.f32.mrf.mxu0
      %1250 = vdwg.mxu0
      %v1252 = vunpack.c.l.b16 %v1068
      %v1253 = vpack.c.b16 %v1252, %v1252
      %v1275 = vunpack.c.l.b16 %v1069
      %v1276 = vunpack.c.l.b16 %v1070
      %v1277 = vunpack.c.l.b16 %v1071
      %v1278 = vunpack.c.l.b16 %v1072
      %v1279 = vunpack.c.l.b16 %v1073
      %v1280 = vunpack.c.l.b16 %v1074
      %v1281 = vunpack.c.l.b16 %v1075
      %v1282 = vunpack.c.l.b16 %v1076
      %v1283 = vunpack.c.l.b16 %v1077
      %v1284 = vunpack.c.l.b16 %v1078
      %v1285 = vunpack.c.l.b16 %v1079
      %v1286 = vunpack.c.l.b16 %v1080
      %v1287 = vunpack.c.l.b16 %v1081
      %v1288 = vunpack.c.l.b16 %v1082
      %v1289 = vunpack.c.l.b16 %v1083
      %v1290 = vunpack.c.l.b16 %v1084
      %v1291 = vpack.c.b16 %v1276, %v1275
      %v1292 = vpack.c.b16 %v1278, %v1277
      %v1293 = vpack.c.b16 %v1280, %v1279
      %v1294 = vpack.c.b16 %v1282, %v1281
      %v1295 = vpack.c.b16 %v1284, %v1283
      %v1296 = vpack.c.b16 %v1286, %v1285
      %v1297 = vpack.c.b16 %v1288, %v1287
      %v1298 = vpack.c.b16 %v1290, %v1289
      %1307 = vmatpush.bf16.msra.mxu0 %v1298
      %1308 = vmatpush.bf16.msra.mxu0 %v1297
      %1309 = vmatpush.bf16.msra.mxu0 %v1296
      %1310 = vmatpush.bf16.msra.mxu0 %v1295
      %1311 = vmatpush.bf16.msra.mxu0 %v1294
      %1312 = vmatpush.bf16.msra.mxu0 %v1293
      %1313 = vmatpush.bf16.msra.mxu0 %v1292
      %1314 = vmatpush.bf16.msra.mxu0 %v1291
      %1315 = vmatmul.bf16.gmra.mxu0 %v1121
      %v1316 = vpop.f32.mrf.mxu0
      %v1317 = vadd.f32 %v1228, %v1316
      %v1318 = vpop.f32.mrf.mxu0
      %v1319 = vadd.f32 %v1230, %v1318
      %1320 = vmatmul.bf16.gmra.mxu0 %v1122
      %v1321 = vpop.f32.mrf.mxu0
      %v1322 = vadd.f32 %v1233, %v1321
      %v1323 = vpop.f32.mrf.mxu0
      %v1324 = vadd.f32 %v1235, %v1323
      %1325 = vmatmul.bf16.gmra.mxu0 %v1123
      %v1326 = vpop.f32.mrf.mxu0
      %v1327 = vadd.f32 %v1238, %v1326
      %v1328 = vpop.f32.mrf.mxu0
      %v1329 = vadd.f32 %v1240, %v1328
      %1330 = vmatmul.bf16.gmra.mxu0 %v1124
      %v1331 = vpop.f32.mrf.mxu0
      %v1332 = vadd.f32 %v1243, %v1331
      %v1333 = vpop.f32.mrf.mxu0
      %v1334 = vadd.f32 %v1245, %v1333
      %1335 = vmatmul.bf16.gmra.mxu0 %v1253
      %v1336 = vpop.f32.mrf.mxu0
      %v1337 = vadd.f32 %v1248, %v1336
      %v1338 = vpop.f32.mrf.mxu0
      %1339 = vdwg.mxu0
      %v1340 = vld [vmem:[#allocation3] sm:$0xe]
      %s1341 = scalar_lea.vmem %s4, 128
      %v1342 = vld [vmem:[%s1341] sm:$0xf]
      %v1343 = vld [vmem:[%s1341 + $0x4] sm:$0xf]
      %v1344 = vld [vmem:[%s1341 + $0x8] sm:$0xf]
      %v1345 = vld [vmem:[%s1341 + $0xc] sm:$0xf]
      %v1346 = vld [vmem:[%s1341 + $0x10] sm:$0xf]
      %v1347 = vld [vmem:[%s1341 + $0x14] sm:$0xf]
      %v1348 = vld [vmem:[%s1341 + $0x18] sm:$0xf]
      %v1349 = vld [vmem:[%s1341 + $0x1c] sm:$0xf]
      %v1350 = vld [vmem:[%s1341 + $0x20] sm:$0xf]
      %v1351 = vld [vmem:[%s1341 + $0x24] sm:$0xf]
      %v1352 = vld [vmem:[%s1341 + $0x28] sm:$0xf]
      %v1353 = vld [vmem:[%s1341 + $0x2c] sm:$0xf]
      %v1354 = vld [vmem:[%s1341 + $0x30] sm:$0xf]
      %v1355 = vld [vmem:[%s1341 + $0x34] sm:$0xf]
      %v1356 = vld [vmem:[%s1341 + $0x38] sm:$0xf]
      %v1357 = vld [vmem:[%s1341 + $0x3c] sm:$0xf]
      %v1359 = vunpack.c.l.b16 %v1340
      %v1360 = vpack.c.b16 %v1113, %v1359
      %v1361 = vrot.slane %v1360, 1
      %v1362 = vrot.slane %v1122, 1
      %v1363 = vsel %vm786, %v1361, %v1362
      %v1364 = vrot.slane %v1123, 1
      %v1365 = vsel %vm786, %v1362, %v1364
      %v1366 = vrot.slane %v1124, 1
      %v1367 = vsel %vm786, %v1364, %v1366
      %v1368 = vrot.slane %v1125, 1
      %v1369 = vsel %vm786, %v1366, %v1368
      %v1391 = vunpack.c.l.b16 %v1342
      %v1392 = vunpack.c.l.b16 %v1343
      %v1393 = vunpack.c.l.b16 %v1344
      %v1394 = vunpack.c.l.b16 %v1345
      %v1395 = vunpack.c.l.b16 %v1346
      %v1396 = vunpack.c.l.b16 %v1347
      %v1397 = vunpack.c.l.b16 %v1348
      %v1398 = vunpack.c.l.b16 %v1349
      %v1399 = vunpack.c.l.b16 %v1350
      %v1400 = vunpack.c.l.b16 %v1351
      %v1401 = vunpack.c.l.b16 %v1352
      %v1402 = vunpack.c.l.b16 %v1353
      %v1403 = vunpack.c.l.b16 %v1354
      %v1404 = vunpack.c.l.b16 %v1355
      %v1405 = vunpack.c.l.b16 %v1356
      %v1406 = vunpack.c.l.b16 %v1357
      %v1407 = vpack.c.b16 %v1392, %v1391
      %v1408 = vpack.c.b16 %v1394, %v1393
      %v1409 = vpack.c.b16 %v1396, %v1395
      %v1410 = vpack.c.b16 %v1398, %v1397
      %v1411 = vpack.c.b16 %v1400, %v1399
      %v1412 = vpack.c.b16 %v1402, %v1401
      %v1413 = vpack.c.b16 %v1404, %v1403
      %v1414 = vpack.c.b16 %v1406, %v1405
      %1423 = vmatpush.bf16.msra.mxu0 %v1414
      %1424 = vmatpush.bf16.msra.mxu0 %v1413
      %1425 = vmatpush.bf16.msra.mxu0 %v1412
      %1426 = vmatpush.bf16.msra.mxu0 %v1411
      %1427 = vmatpush.bf16.msra.mxu0 %v1410
      %1428 = vmatpush.bf16.msra.mxu0 %v1409
      %1429 = vmatpush.bf16.msra.mxu0 %v1408
      %1430 = vmatpush.bf16.msra.mxu0 %v1407
      %1431 = vmatmul.bf16.gmra.mxu0 %v1363
      %v1432 = vpop.f32.mrf.mxu0
      %v1433 = vadd.f32 0.0, %v1432
      %v1434 = vpop.f32.mrf.mxu0
      %v1435 = vadd.f32 0.0, %v1434
      %1436 = vmatmul.bf16.gmra.mxu0 %v1365
      %v1437 = vpop.f32.mrf.mxu0
      %v1438 = vadd.f32 0.0, %v1437
      %v1439 = vpop.f32.mrf.mxu0
      %v1440 = vadd.f32 0.0, %v1439
      %1441 = vmatmul.bf16.gmra.mxu0 %v1367
      %v1442 = vpop.f32.mrf.mxu0
      %v1443 = vadd.f32 0.0, %v1442
      %v1444 = vpop.f32.mrf.mxu0
      %v1445 = vadd.f32 0.0, %v1444
      %1446 = vmatmul.bf16.gmra.mxu0 %v1369
      %v1447 = vpop.f32.mrf.mxu0
      %v1448 = vadd.f32 0.0, %v1447
      %v1449 = vpop.f32.mrf.mxu0
      %v1450 = vadd.f32 0.0, %v1449
      %1451 = vmatmul.bf16.gmra.mxu0 %v1368
      %v1452 = vpop.f32.mrf.mxu0
      %v1453 = vadd.f32 0.0, %v1452
      %v1454 = vpop.f32.mrf.mxu0
      %1455 = vdwg.mxu0
      %v1456 = vadd.f32 %v1317, %v1433
      %v1457 = vadd.f32 %v1319, %v1435
      %v1458 = vadd.f32 %v1322, %v1438
      %v1459 = vadd.f32 %v1324, %v1440
      %v1460 = vadd.f32 %v1327, %v1443
      %v1461 = vadd.f32 %v1329, %v1445
      %v1462 = vadd.f32 %v1332, %v1448
      %v1463 = vadd.f32 %v1334, %v1450
      %v1464 = vadd.f32 %v1337, %v1453
      %v1465 = vld [vmem:[%s5] sm:$0x1]
      %v1467 = vperm.slane %v1465, 0
      %v1469 = vmul.f32 %v1456, %v1467
      %v1470 = vmul.f32 %v1457, %v1467
      %v1471 = vld [vmem:[%s6] sm:$0x1]
      %v1473 = vperm.slane %v1471, 0
      %v1475 = vadd.f32 %v1469, %v1473
      %v1476 = vadd.f32 %v1470, %v1473
      %v1477 = vld [vmem:[%s278] sm:$0xff]
      %v1478 = vld [vmem:[%s278 + $0x8] sm:$0xff]
      %v1479 = vadd.f32 %v1475, %v1477
      %v1480 = vadd.f32 %v1476, %v1478
      %v1481 = vmax.f32 %v1479, 0.0
      %v1482 = vmax.f32 %v1480, 0.0
      %1483 = vst [vmem:[%s285] sm:$0xff] %v1481
      %1484 = vst [vmem:[%s285 + $0x8] sm:$0xff] %v1482
      %v1485 = vld [vmem:[%s5] sm:$0x1]
      %v1487 = vperm.slane %v1485, 0
      %v1489 = vmul.f32 %v1458, %v1487
      %v1490 = vmul.f32 %v1459, %v1487
      %v1491 = vmul.f32 %v1460, %v1487
      %v1492 = vld [vmem:[%s6] sm:$0x1]
      %v1494 = vperm.slane %v1492, 0
      %v1496 = vadd.f32 %v1489, %v1494
      %v1497 = vadd.f32 %v1490, %v1494
      %v1498 = vadd.f32 %v1491, %v1494
      %v1499 = vld [vmem:[%s345] sm:$0xff]
      %v1500 = vld [vmem:[%s345 + $0x8] sm:$0xff]
      %vm1503 = vcmask 1041408
      %v1504 = vrot.slane %v1499, 6
      %v1505 = vrot.slane %v1500, 6
      %v1506 = vsel %vm1503, %v1504, %v1505
      %v1510 = vadd.f32 %v1496, %v1504
      %v1511 = vadd.f32 %v1497, %v1506
      %v1512 = vadd.f32 %v1498, %v1505
      %v1513 = vmax.f32 %v1510, 0.0
      %v1514 = vmax.f32 %v1511, 0.0
      %v1515 = vmax.f32 %v1512, 0.0
      %s1516 = scalar_lea.vmem %s285, 16
      %1517 = vst [vmem:[%s1516 - $0x2] sm:$0xfc] %v1513
      %1518 = vst [vmem:[%s1516 + $0x6] sm:$0xff] %v1514
      %1519 = vst [vmem:[%s1516 + $0xe] sm:$0x3] %v1515
      %v1520 = vld [vmem:[%s5] sm:$0x1]
      %v1522 = vperm.slane %v1520, 0
      %v1524 = vmul.f32 %v1460, %v1522
      %v1525 = vmul.f32 %v1461, %v1522
      %v1526 = vmul.f32 %v1462, %v1522
      %v1527 = vld [vmem:[%s6] sm:$0x1]
      %v1529 = vperm.slane %v1527, 0
      %v1531 = vadd.f32 %v1524, %v1529
      %v1532 = vadd.f32 %v1525, %v1529
      %v1533 = vadd.f32 %v1526, %v1529
      %v1534 = vld [vmem:[%s396] sm:$0xff]
      %v1535 = vld [vmem:[%s396 + $0x8] sm:$0xff]
      %vm1538 = vcmask 1043456
      %v1539 = vrot.slane %v1534, 4
      %v1540 = vrot.slane %v1535, 4
      %v1541 = vsel %vm1538, %v1539, %v1540
      %v1545 = vadd.f32 %v1531, %v1539
      %v1546 = vadd.f32 %v1532, %v1541
      %v1547 = vadd.f32 %v1533, %v1540
      %v1548 = vmax.f32 %v1545, 0.0
      %v1549 = vmax.f32 %v1546, 0.0
      %v1550 = vmax.f32 %v1547, 0.0
      %s1551 = scalar_lea.vmem %s285, 32
      %1552 = vst [vmem:[%s1551 - $0x4] sm:$0xf0] %v1548
      %1553 = vst [vmem:[%s1551 + $0x4] sm:$0xff] %v1549
      %1554 = vst [vmem:[%s1551 + $0xc] sm:$0xf] %v1550
      %v1555 = vld [vmem:[%s5] sm:$0x1]
      %v1557 = vperm.slane %v1555, 0
      %v1559 = vmul.f32 %v1462, %v1557
      %v1560 = vmul.f32 %v1463, %v1557
      %v1561 = vmul.f32 %v1464, %v1557
      %v1562 = vld [vmem:[%s6] sm:$0x1]
      %v1564 = vperm.slane %v1562, 0
      %v1566 = vadd.f32 %v1559, %v1564
      %v1567 = vadd.f32 %v1560, %v1564
      %v1568 = vadd.f32 %v1561, %v1564
      %v1569 = vld [vmem:[%s447] sm:$0xff]
      %v1570 = vld [vmem:[%s447 + $0x8] sm:$0xff]
      %vm1573 = vcmask 1045504
      %v1574 = vrot.slane %v1569, 2
      %v1575 = vrot.slane %v1570, 2
      %v1576 = vsel %vm1573, %v1574, %v1575
      %v1580 = vadd.f32 %v1566, %v1574
      %v1581 = vadd.f32 %v1567, %v1576
      %v1582 = vadd.f32 %v1568, %v1575
      %v1583 = vmax.f32 %v1580, 0.0
      %v1584 = vmax.f32 %v1581, 0.0
      %v1585 = vmax.f32 %v1582, 0.0
      %s1586 = scalar_lea.vmem %s285, 48
      %1587 = vst [vmem:[%s1586 - $0x6] sm:$0xc0] %v1583
      %1588 = vst [vmem:[%s1586 + $0x2] sm:$0xff] %v1584
      %1589 = vst [vmem:[%s1586 + $0xa] sm:$0x3f] %v1585
      %s1590 = smul.u32 4, %s18
      %p1591 = scmp.lt.s32.totalorder %s1590, 7
      %s1592 = scalar_select %p1591, %s1590, 7
      %s1593 = smul.addr %s1592, 2
      %s1594 = smul.addr %s1593, 8
      %s1595 = scalar_lea.vmem %s7, %s1594
      // Predicated region
      $region49: #{basic_block.1} parent=47 // pred_check
        %p1596 = pneg %p188
      $region50: #{basic_block.1} parent=47 // pred_check_branch
        %1598 = sbr.rel (%p1596) target = $region52
      $region51: #{basic_block.1} parent=47 // pred_region
        %s1599 = smul.u32 4, %s18
      $region52: #{basic_block.1} parent=47 // pred_fallthru
        _
    $region48: #{basic_block.1} parent=5 // pred_fallthru
      _
    %p1600 = scmp.le.s32.totalorder 2, %s13
    // Predicated region
    $region53: #{basic_block.1} parent=5 // pred_check
      %p1601 = pneg %p1600
    $region54: #{basic_block.1} parent=5 // pred_check_branch
      %1603 = sbr.rel (%p1601) target = $region56
    $region55: #{basic_block.1} parent=5 // pred_region
      %s1604 = ssub.s32 %s13, 2
      // Predicated region
      $region57: #{basic_block.1} parent=55 // pred_check
        %p1605 = pneg %p194
      $region58: #{basic_block.1} parent=55 // pred_check_branch
        %1607 = sbr.rel (%p1605) target = $region60
      $region59: #{basic_block.1} parent=55 // pred_region
        %s1608 = smul.u32 4, %s19
        %p1609 = scmp.lt.s32.totalorder %s1608, 7
        %s1610 = scalar_select %p1609, %s1608, 7
        %s1611 = smul.addr %s1610, 2
        %s1612 = smul.addr %s1611, 8
        %s1613 = scalar_lea.vmem %s7, %s1612
      $region60: #{basic_block.1} parent=55 // pred_fallthru
        _
    $region56: #{basic_block.1} parent=5 // pred_fallthru
      _
  $region6: #{basic_block.1} parent=0 // loop_footer
    %s17 = sadd.s32 1, %s13
  $region7: #{basic_block.1} parent=0 // loop_footer_branch
    %12 = sbr.rel target = $region3
  $region8: #{basic_block.1} parent=0 // loop_exit
    _

</llo_original>
